<compile_context>
chip_gen: v6e
topology: v6e:2x2x1
jax: 0.10.0
libtpu: 0.0.40
codegen_flags: <defaults>
</compile_context>

<pallas_src>
import math
from functools import partial

import numpy as np
import jax
import jax.numpy as jnp
from jax import lax
from jax.experimental import pallas as pl
from jax.experimental.pallas import tpu as pltpu

NEG_INF = -1e30


# ---------------------------------------------------------------------------
# Kernel: fused qkv projection + KxK neighborhood attention + out_proj epilogue
# ---------------------------------------------------------------------------
def _na_head_kernel(mask_ref, wq_ref, bq_ref, wkv_ref, wo_ref, xq_ref, *rest,
                    n_heads, d_pad):
    xk_refs, o_ref = rest[:-1], rest[-1]
    nd = n_heads * d_pad

    xq = xq_ref[...]                                            # (Cin, tq)  bf16
    if len(xk_refs) == 1:
        xk = xk_refs[0][...]                                    # (Cin, nK)  bf16
    else:  # [prev, cur, next] row-tile halo, lane-aligned concat
        xk = jnp.concatenate([r[...] for r in xk_refs], axis=-1)

    # Fused 1x1 projections on the MXU (bf16 in, f32 accumulation).
    # 1/sqrt(d) is pre-folded into wq/bq; b_k dropped; b_v folded into the
    # wrapper-side output bias.
    q_all = (jnp.dot(wq_ref[...], xq, preferred_element_type=jnp.float32)
             + bq_ref[...])                                     # (nd, tq)   f32
    kv = jnp.dot(wkv_ref[...], xk,
                 preferred_element_type=jnp.float32)            # (2nd, nK)  f32
    k_all = kv[:nd].astype(jnp.bfloat16)
    v_all = kv[nd:].astype(jnp.bfloat16)

    bias = mask_ref[...]                                        # (tq, nK)   f32
    acc = jnp.zeros(o_ref.shape, jnp.float32)                   # (Cout, tq)

    for h in range(n_heads):  # unrolled: n_heads is small here
        # TODO(synk): switch to lax.fori_loop + VMEM scratch for many heads.
        sl = slice(h * d_pad, (h + 1) * d_pad)                  # 8-sublane aligned
        q = q_all[sl].astype(jnp.bfloat16)                      # (d_pad, tq)
        logits = lax.dot_general(q, k_all[sl],                  # (tq, nK)  f32
                                 (((0,), (0,)), ((), ())),
                                 preferred_element_type=jnp.float32) + bias
        # f32 softmax statistics (v5e has no bf16 VPU/EUP)
        m = jnp.max(logits, axis=-1, keepdims=True)
        p = jnp.exp(logits - m)
        l = jnp.sum(p, axis=-1, keepdims=True)                  # (tq, 1)
        o = lax.dot_general(v_all[sl], p.astype(jnp.bfloat16),  # (d_pad, tq)
                            (((1,), (1,)), ((), ())),
                            preferred_element_type=jnp.float32)
        # deferred softmax normalization: scale the small output, not p
        o = o * pl.reciprocal(l, approx=True).T
        # out_proj epilogue for this sub-head's channel slice
        acc = acc + lax.dot_general(wo_ref[sl], o.astype(jnp.bfloat16),
                                    (((0,), (0,)), ((), ())),
                                    preferred_element_type=jnp.float32)
    o_ref[...] = acc.astype(o_ref.dtype)


# ---------------------------------------------------------------------------
# Tiling / mask-table helpers (host side)
# ---------------------------------------------------------------------------
def _pick_row_tile(hs, ws, ksize, target_pixels=128, max_pixels=512):
    """Row tile tr | hs.  Prefers the smallest lane-dense tile
    (tr*ws % 128 == 0 and >= target) under a VMEM-motivated pixel cap,
    otherwise the largest valid tile.  With > 3 row tiles the +-1-tile key
    halo must cover the clamped window, which needs tr >= ksize - 1."""
    divs = [d for d in range(1, hs + 1) if hs % d == 0]
    ok = [d for d in divs
          if d * ws <= max_pixels and (hs // d <= 3 or d >= max(ksize - 1, 1))]
    if not ok:
        # TODO(synk): very wide feature maps / large windows would need an
        # additional column tiling of the key halo.
        raise ValueError(f"no valid NA row tiling for hs={hs}, ws={ws}, k={ksize}")
    lane = [d for d in ok if (d * ws) % 128 == 0 and d * ws >= target_pixels]
    return min(lane, key=lambda d: d * ws) if lane else max(ok)


def _build_mask_bias(hs, ws, ksize, tr):
    """Additive attention bias (0 / -1e30), hoisted out of the kernel.
    nt <= 3 : keys are the whole image, one (tq, hs*ws) variant per row tile.
    nt >  3 : keys are the [prev, cur, next] row-tile halo; 3 variants
              (first / interior / last row tile)."""
    nt, tq, pad = hs // tr, tr * ws, ksize // 2
    relative = nt > 3
    reps = [0, 1, nt - 1] if relative else list(range(nt))
    nk = 3 * tq if relative else hs * ws
    bias = np.full((len(reps), tq, nk), NEG_INF, np.float32)
    for vi, t in enumerate(reps):
        qpix = t * tq + np.arange(tq)
        qr, qc = qpix // ws, qpix % ws
        r0 = np.clip(qr - pad, 0, hs - ksize)
        c0 = np.clip(qc - pad, 0, ws - ksize)
        if relative:
            kk = np.arange(nk)
            blk, kin = kk // tq, kk % tq
            ktile = np.clip(t - 1 + blk, 0, nt - 1)
            kpix = ktile * tq + kin
            # drop clamped duplicate halo blocks at the image border
            blk_ok = (blk == 1) | ((blk == 0) & (t > 0)) | ((blk == 2) & (t < nt - 1))
        else:
            kpix = np.arange(nk)
            blk_ok = np.ones(nk, bool)
        kr, kc = kpix // ws, kpix % ws
        inside = ((kr[None] >= r0[:, None]) & (kr[None] < (r0 + ksize)[:, None]) &
                  (kc[None] >= c0[:, None]) & (kc[None] < (c0 + ksize)[:, None]) &
                  blk_ok[None])
        bias[vi] = np.where(inside, 0.0, NEG_INF)
    return jnp.asarray(bias)


# ---------------------------------------------------------------------------
# pallas_call wrapper for one shared-scale head
# ---------------------------------------------------------------------------
def fused_na_head(x_s, mask_bias, wq_p, bq_p, wkv_p, wo_t_p, *,
                  n_heads, d_pad, hs, ws, tr):
    """x_s: (B, Cin, Hs*Ws) bf16 -> (B, Cout, Hs*Ws) bf16 (out_proj partial)."""
    bsz, cin, p = x_s.shape
    cout = wo_t_p.shape[1]
    nd = n_heads * d_pad
    tq, nt = tr * ws, hs // tr
    relative = nt > 3
    nk = 3 * tq if relative else p

    kern = partial(_na_head_kernel, n_heads=n_heads, d_pad=d_pad)

    def const2(shape):  # weights: constant block index -> stays resident in VMEM
        return pl.BlockSpec(shape, lambda bi, ti: (0, 0))

    if relative:
        mask_spec = pl.BlockSpec(
            (None, tq, nk),
            # variant: 0 = first row tile, 1 = interior, 2 = last
            lambda bi, ti: (jnp.clip(ti, 0, 1) + jnp.clip(ti - (nt - 2), 0, 1), 0, 0))
        xk_specs = [
            pl.BlockSpec((None, cin, tq),
                         lambda bi, ti: (bi, 0, jnp.maximum(ti - 1, 0))),
            pl.BlockSpec((None, cin, tq), lambda bi, ti: (bi, 0, ti)),
            pl.BlockSpec((None, cin, tq),
                         lambda bi, ti: (bi, 0, jnp.minimum(ti + 1, nt - 1))),
        ]
        xk_args = (x_s, x_s, x_s)
    else:
        mask_spec = pl.BlockSpec((None, tq, nk), lambda bi, ti: (ti, 0, 0))
        xk_specs = [pl.BlockSpec((None, cin, p), lambda bi, ti: (bi, 0, 0))]
        xk_args = (x_s,)

    return pl.pallas_call(
        kern,
        out_shape=jax.ShapeDtypeStruct((bsz, cout, p), jnp.bfloat16),
        grid_spec=pltpu.PrefetchScalarGridSpec(
            num_scalar_prefetch=0,
            grid=(bsz, nt),
            in_specs=[
                mask_spec,
                const2((nd, cin)),        # W_q   (scaled, padded, bf16)
                const2((nd, 1)),          # b_q   (scaled, padded, f32)
                const2((2 * nd, cin)),    # [W_k; W_v] (padded, bf16)
                const2((nd, cout)),       # W_out^T slice (padded, bf16)
                pl.BlockSpec((None, cin, tq), lambda bi, ti: (bi, 0, ti)),  # queries
                *xk_specs,                                                   # keys
            ],
            out_specs=pl.BlockSpec((None, cout, tq), lambda bi, ti: (bi, 0, ti)),
        ),
        compiler_params=pltpu.CompilerParams(
            dimension_semantics=("parallel", "parallel")),
    )(mask_bias, wq_p, bq_p, wkv_p, wo_t_p, x_s, *xk_args)


# ---------------------------------------------------------------------------
# Wrapper-side glue (pure JAX, channels-first)
# ---------------------------------------------------------------------------
def interpolate_nearest(x, size):
    """F.interpolate(x, size=size, mode='nearest') for NCHW tensors."""
    _, _, h, w = x.shape
    oh, ow = size
    if (h, w) == (oh, ow):
        return x
    # TODO(synk): floor(i*h/oh) matches torch 'nearest' only for integer ratios.
    ri = (jnp.arange(oh) * h // oh).astype(jnp.int32)
    ci = (jnp.arange(ow) * w // ow).astype(jnp.int32)
    return x[:, :, ri[:, None], ci[None, :]]


def na_neighbor_indices(h, w, ksize):
    """NATTEN-style clamped KxK window flat indices: (h*w, K*K) (reference)."""
    r = jnp.arange(h)
    row_start = jnp.clip(r - ksize // 2, 0, h - ksize)
    rows = row_start[:, None] + jnp.arange(ksize)[None, :]
    c = jnp.arange(w)
    col_start = jnp.clip(c - ksize // 2, 0, w - ksize)
    cols = col_start[:, None] + jnp.arange(ksize)[None, :]
    idx = rows[:, None, :, None] * w + cols[None, :, None, :]
    return idx.reshape(h * w, ksize * ksize)


def _pad_subheads(w, n_heads, d, d_pad):
    """(n*d, X) -> (n*d_pad, X): zero rows appended inside each sub-head block."""
    w = w.reshape(n_heads, d, -1)
    w = jnp.pad(w, ((0, 0), (0, d_pad - d), (0, 0)))
    return w.reshape(n_heads * d_pad, -1)


class SharedScaleNAHead:
    """Concrete stand-in for the abstract shared-scale NA attention head.

    Subsamples the input by `scale`, then runs one fused Pallas kernel
    (qkv projection + KxK neighborhood attention + the head's out_proj slice)
    and returns a (B, Cout, Hs, Ws) channels-first partial of the out_proj."""

    def __init__(self, key, in_channels, num_heads, intermediate_channels,
                 kernel_size, scale):
        self.cin = in_channels
        self.num_heads = num_heads
        self.d = intermediate_channels
        self.d_pad = ((intermediate_channels + 7) // 8) * 8  # aligned sub-head slices
        self.k = kernel_size
        self.scale = scale
        nd = num_heads * intermediate_channels
        bound = 1.0 / math.sqrt(in_channels)
        ks = jax.random.split(key, 6)

        def u(kk, shp):  # weights kept in bf16 (the kernel's operand dtype)
            return jax.random.uniform(kk, shp, jnp.float32,
                                      -bound, bound).astype(jnp.bfloat16)

        self.w_q, self.b_q = u(ks[0], (nd, in_channels)), u(ks[1], (nd,))
        self.w_k, self.b_k = u(ks[2], (nd, in_channels)), u(ks[3], (nd,))
        self.w_v, self.b_v = u(ks[4], (nd, in_channels)), u(ks[5], (nd,))

        # Packed kernel-side weights:
        #  * 1/sqrt(d) folded into W_q / b_q
        #  * b_k dropped (softmax is invariant to a per-query constant shift)
        #  * b_v folded into the module-level output bias (sum_j p_ij == 1)
        #  * W_k / W_v stacked -> a single key/value projection matmul
        n, d, dp = num_heads, intermediate_channels, self.d_pad
        sc = 1.0 / math.sqrt(intermediate_channels)
        wq32 = self.w_q.astype(jnp.float32) * sc
        bq32 = self.b_q.astype(jnp.float32) * sc
        self.wq_p = _pad_subheads(wq32, n, d, dp).astype(jnp.bfloat16)
        self.bq_p = _pad_subheads(bq32.reshape(nd, 1), n, d, dp)          # f32
        self.wkv_p = jnp.concatenate(
            [_pad_subheads(self.w_k.astype(jnp.float32), n, d, dp),
             _pad_subheads(self.w_v.astype(jnp.float32), n, d, dp)],
            axis=0).astype(jnp.bfloat16)

    def pack_out_proj(self, w_out_slice):
        """(Cout, n*d) slice of W_out -> (n*d_pad, Cout) bf16 epilogue weight."""
        wo_t = _pad_subheads(w_out_slice.astype(jnp.float32).T,
                             self.num_heads, self.d, self.d_pad)
        return wo_t.astype(jnp.bfloat16)

    def __call__(self, x, wo_t_p):
        """x: (B, Cin, H, W) bf16 -> (B, Cout, Hs, Ws) bf16 out_proj partial."""
        b = x.shape[0]
        xs = x[:, :, ::self.scale, ::self.scale]
        hs, ws = xs.shape[2], xs.shape[3]
        assert hs >= self.k and ws >= self.k, "feature map smaller than NA window"
        tr = _pick_row_tile(hs, ws, self.k)
        mask_bias = _build_mask_bias(hs, ws, self.k, tr)
        out = fused_na_head(
            xs.reshape(b, self.cin, hs * ws), mask_bias,
            self.wq_p, self.bq_p, self.wkv_p, wo_t_p,
            n_heads=self.num_heads, d_pad=self.d_pad, hs=hs, ws=ws, tr=tr)
        return out.reshape(b, wo_t_p.shape[1], hs, ws)


class MulitScaleMultiHeadNAPallas:
    """JAX/Pallas equivalent of MulitScaleMultiHeadNA.forward (inference).

    The nearest-upsample + concat + 1x1 out_proj of the reference is
    re-associated: each head applies its W_out slice inside the kernel at its
    native resolution; the wrapper nearest-upsamples and sums the Cout-channel
    partials and adds the (folded) bias once."""

    def __init__(self, key, in_channels, head_params, out_channels,
                 scale_factor=1, dropout=0.2):
        keys = jax.random.split(key, len(head_params) + 1)
        self.heads = [SharedScaleNAHead(k, in_channels, **hp)
                      for k, hp in zip(keys[:-1], head_params)]
        c_total = sum(hp["intermediate_channels"] * hp["num_heads"]
                      for hp in head_params)
        bound = 1.0 / math.sqrt(c_total)
        kw, kb = jax.random.split(keys[-1])
        self.w_out = jax.random.uniform(
            kw, (out_channels, c_total), jnp.float32, -bound, bound
        ).astype(jnp.bfloat16)
        self.b_out = jax.random.uniform(
            kb, (out_channels,), jnp.float32, -bound, bound)
        self.scale_factor = scale_factor
        self.out_channels = out_channels
        # TODO(synk): nn.Dropout is identity at inference; training-mode dropout
        # (scaled Bernoulli mask on each head output) is not implemented here.

        # Per-head packed W_out slices + folded output bias
        # b_eff = b_out + sum_heads W_out_slice @ b_v  (valid since sum_j p == 1)
        self.wo_t_heads = []
        b_eff = self.b_out
        off = 0
        for head, hp in zip(self.heads, head_params):
            ncd = hp["intermediate_channels"] * hp["num_heads"]
            w_slice = self.w_out[:, off:off + ncd]
            off += ncd
            self.wo_t_heads.append(head.pack_out_proj(w_slice))
            b_eff = b_eff + (w_slice.astype(jnp.float32)
                             @ head.b_v.astype(jnp.float32))
        self.b_eff = b_eff

    def __call__(self, x):
        b, _, h, w = x.shape
        if self.scale_factor != 1:
            # TODO(synk): bilinear scale_fn (scale_factor != 1) not implemented;
            # this script exercises the scale_factor == 1 Identity branch.
            raise NotImplementedError("bilinear scale_fn not implemented")
        xb = x.astype(jnp.bfloat16)
        acc = None
        for head, wo_t in zip(self.heads, self.wo_t_heads):
            part = head(xb, wo_t)                                  # (B,Cout,hs,ws)
            part = interpolate_nearest(part, (h, w)).astype(jnp.float32)
            acc = part if acc is None else acc + part
        return acc + self.b_eff[None, :, None, None]


# ---------------------------------------------------------------------------
# Pure-JAX reference (gather formulation) used only for validation
# ---------------------------------------------------------------------------
def _reference_forward(model, x):
    b, c, h, w = x.shape
    xb = x.astype(jnp.bfloat16).astype(jnp.float32)   # same quantized input
    f32 = lambda a: a.astype(jnp.float32)
    outs = []
    for head in model.heads:
        xs = xb[:, :, ::head.scale, ::head.scale]
        hs, ws = xs.shape[2], xs.shape[3]
        xf = xs.reshape(b, c, hs * ws)
        q = jnp.einsum("oc,bcp->bop", f32(head.w_q), xf) + f32(head.b_q)[None, :, None]
        k = jnp.einsum("oc,bcp->bop", f32(head.w_k), xf) + f32(head.b_k)[None, :, None]
        v = jnp.einsum("oc,bcp->bop", f32(head.w_v), xf) + f32(head.b_v)[None, :, None]
        n, d = head.num_heads, head.d
        qh = q.reshape(b, n, d, hs * ws)
        kh = k.reshape(b, n, d, hs * ws)
        vh = v.reshape(b, n, d, hs * ws)
        idx = na_neighbor_indices(hs, ws, head.k)
        k_nb = kh[:, :, :, idx]                              # (B, n, d, P, K2)
        v_nb = vh[:, :, :, idx]
        logits = jnp.einsum("bndp,bndpk->bnpk", qh, k_nb) / math.sqrt(d)
        p_att = jax.nn.softmax(logits, axis=-1)
        o = jnp.einsum("bnpk,bndpk->bndp", p_att, v_nb)
        outs.append(interpolate_nearest(o.reshape(b, n * d, hs, ws), (h, w)))
    comb = jnp.concatenate(outs, axis=1)
    return (jnp.einsum("oc,bchw->bohw", f32(model.w_out), comb)
            + model.b_out[None, :, None, None])


if __name__ == "__main__":
    key = jax.random.PRNGKey(0)
    kx, kx2, kp = jax.random.split(key, 3)

    B, C, H, W = 2, 4, 16, 16
    x = jax.random.normal(kx, (B, C, H, W), jnp.float32)

    head_params = [
        dict(num_heads=2, intermediate_channels=4, kernel_size=3, scale=1),
        dict(num_heads=2, intermediate_channels=4, kernel_size=3, scale=2),
    ]
    model = MulitScaleMultiHeadNAPallas(
        kp, in_channels=C, head_params=head_params,
        out_channels=8, scale_factor=1)

    y = model(x)
    jax.block_until_ready(y)
    assert y.shape == (B, 8, H, W), y.shape
    assert bool(jnp.all(jnp.isfinite(y)))
    err = float(jnp.max(jnp.abs(y - _reference_forward(model, x))))
    assert err < 5e-2, f"mismatch vs reference: {err}"

    # Taller input exercises the >3-row-tile [prev, cur, next] halo path.
    x2 = jax.random.normal(kx2, (1, C, 32, 16), jnp.float32)
    y2 = model(x2)
    jax.block_until_ready(y2)
    assert y2.shape == (1, 8, 32, 16), y2.shape
    err2 = float(jnp.max(jnp.abs(y2 - _reference_forward(model, x2))))
    assert err2 < 5e-2, f"mismatch vs reference (tall input): {err2}"

    print("KERNEL_OK")
</pallas_src>

<mosaic_0001>
module attributes {stable_mosaic.version = 11 : i64} {
  func.func @_na_head_kernel(%arg0: i32, %arg1: i32, %arg2: memref<1x128x256xf32, #tpu.memory_space<vmem>>, %arg3: memref<16x4xbf16, #tpu.memory_space<vmem>>, %arg4: memref<16x1xf32, #tpu.memory_space<vmem>>, %arg5: memref<32x4xbf16, #tpu.memory_space<vmem>>, %arg6: memref<16x8xbf16, #tpu.memory_space<vmem>>, %arg7: memref<1x4x128xbf16, #tpu.memory_space<vmem>>, %arg8: memref<1x4x256xbf16, #tpu.memory_space<vmem>>, %arg9: memref<1x8x128xbf16, #tpu.memory_space<vmem>>) attributes {dimension_semantics = [#tpu.dimension_semantics<parallel>, #tpu.dimension_semantics<parallel>], iteration_bounds = array<i64: 2, 2>, scalar_prefetch = 0 : i64, scratch_operands = 0 : i64, tpu.core_type = #tpu.core_type<tc>, window_params = [{transform_indices = @transform_0, window_bounds = array<i64: 1, 128, 256>}, {pipeline_mode = #tpu.pipeline_mode<synchronous>, transform_indices = @transform_1, window_bounds = array<i64: 16, 4>}, {pipeline_mode = #tpu.pipeline_mode<synchronous>, transform_indices = @transform_2, window_bounds = array<i64: 16, 1>}, {pipeline_mode = #tpu.pipeline_mode<synchronous>, transform_indices = @transform_3, window_bounds = array<i64: 32, 4>}, {pipeline_mode = #tpu.pipeline_mode<synchronous>, transform_indices = @transform_4, window_bounds = array<i64: 16, 8>}, {transform_indices = @transform_5, window_bounds = array<i64: 1, 4, 128>}, {transform_indices = @transform_6, window_bounds = array<i64: 1, 4, 256>}, {transform_indices = @transform_7, window_bounds = array<i64: 1, 8, 128>}]} {
    %c0 = arith.constant 0 : index
    %c0_0 = arith.constant 0 : index
    %c0_1 = arith.constant 0 : index
    %0 = vector.load %arg7[%c0, %c0_0, %c0_1] : memref<1x4x128xbf16, #tpu.memory_space<vmem>>, vector<1x4x128xbf16>
    %1 = vector.shape_cast %0 : vector<1x4x128xbf16> to vector<4x128xbf16>
    %c0_2 = arith.constant 0 : index
    %c0_3 = arith.constant 0 : index
    %c0_4 = arith.constant 0 : index
    %2 = vector.load %arg8[%c0_2, %c0_3, %c0_4] : memref<1x4x256xbf16, #tpu.memory_space<vmem>>, vector<1x4x256xbf16>
    %3 = vector.shape_cast %2 : vector<1x4x256xbf16> to vector<4x256xbf16>
    %c0_5 = arith.constant 0 : index
    %c0_6 = arith.constant 0 : index
    %4 = vector.load %arg3[%c0_5, %c0_6] : memref<16x4xbf16, #tpu.memory_space<vmem>>, vector<16x4xbf16>
    %cst = arith.constant dense<0.000000e+00> : vector<16x128xf32>
    %5 = tpu.matmul %4, %1, %cst {dimension_numbers = #tpu.dot_dimension_numbers<[1], [0], [0], [1], [0, 0, 1, 1], [], []>} : vector<16x4xbf16>, vector<4x128xbf16>, vector<16x128xf32> -> vector<16x128xf32>
    %c0_7 = arith.constant 0 : index
    %c0_8 = arith.constant 0 : index
    %6 = vector.load %arg4[%c0_7, %c0_8] : memref<16x1xf32, #tpu.memory_space<vmem>>, vector<16x1xf32>
    %7 = vector.broadcast %6 : vector<16x1xf32> to vector<16x128xf32>
    %8 = arith.addf %5, %7 : vector<16x128xf32>
    %c0_9 = arith.constant 0 : index
    %c0_10 = arith.constant 0 : index
    %9 = vector.load %arg5[%c0_9, %c0_10] : memref<32x4xbf16, #tpu.memory_space<vmem>>, vector<32x4xbf16>
    %cst_11 = arith.constant dense<0.000000e+00> : vector<32x256xf32>
    %10 = tpu.matmul %9, %3, %cst_11 {dimension_numbers = #tpu.dot_dimension_numbers<[1], [0], [0], [1], [0, 0, 1, 1], [], []>} : vector<32x4xbf16>, vector<4x256xbf16>, vector<32x256xf32> -> vector<32x256xf32>
    %11 = vector.extract_strided_slice %10 {offsets = [0, 0], sizes = [16, 256], strides = [1, 1]} : vector<32x256xf32> to vector<16x256xf32>
    %12 = arith.truncf %11 : vector<16x256xf32> to vector<16x256xbf16>
    %13 = vector.extract_strided_slice %10 {offsets = [16, 0], sizes = [16, 256], strides = [1, 1]} : vector<32x256xf32> to vector<16x256xf32>
    %14 = arith.truncf %13 : vector<16x256xf32> to vector<16x256xbf16>
    %c0_12 = arith.constant 0 : index
    %c0_13 = arith.constant 0 : index
    %c0_14 = arith.constant 0 : index
    %15 = vector.load %arg2[%c0_12, %c0_13, %c0_14] : memref<1x128x256xf32, #tpu.memory_space<vmem>>, vector<1x128x256xf32>
    %16 = vector.shape_cast %15 : vector<1x128x256xf32> to vector<128x256xf32>
    %cst_15 = arith.constant 0.000000e+00 : f32
    %17 = vector.broadcast %cst_15 : f32 to vector<8x128xf32>
    %18 = vector.extract_strided_slice %8 {offsets = [0, 0], sizes = [8, 128], strides = [1, 1]} : vector<16x128xf32> to vector<8x128xf32>
    %19 = arith.truncf %18 : vector<8x128xf32> to vector<8x128xbf16>
    %20 = vector.extract_strided_slice %12 {offsets = [0, 0], sizes = [8, 256], strides = [1, 1]} : vector<16x256xbf16> to vector<8x256xbf16>
    %cst_16 = arith.constant dense<0.000000e+00> : vector<128x256xf32>
    %21 = tpu.matmul %19, %20, %cst_16 {dimension_numbers = #tpu.dot_dimension_numbers<[0], [0], [1], [1], [0, 1, 1, 1], [], []>} : vector<8x128xbf16>, vector<8x256xbf16>, vector<128x256xf32> -> vector<128x256xf32>
    %22 = arith.addf %21, %16 : vector<128x256xf32>
    %cst_17 = arith.constant dense<0xFF800000> : vector<128xf32>
    %23 = vector.multi_reduction <maximumf>, %22, %cst_17 [1] : vector<128x256xf32> to vector<128xf32>
    %24 = vector.shape_cast %23 : vector<128xf32> to vector<128x1xf32>
    %25 = vector.broadcast %24 : vector<128x1xf32> to vector<128x256xf32>
    %26 = arith.subf %22, %25 : vector<128x256xf32>
    %27 = math.exp %26 : vector<128x256xf32>
    %cst_18 = arith.constant dense<0.000000e+00> : vector<128xf32>
    %28 = vector.multi_reduction <add>, %27, %cst_18 [1] : vector<128x256xf32> to vector<128xf32>
    %29 = vector.shape_cast %28 : vector<128xf32> to vector<128x1xf32>
    %30 = vector.extract_strided_slice %14 {offsets = [0, 0], sizes = [8, 256], strides = [1, 1]} : vector<16x256xbf16> to vector<8x256xbf16>
    %31 = arith.truncf %27 : vector<128x256xf32> to vector<128x256xbf16>
    %cst_19 = arith.constant dense<0.000000e+00> : vector<8x128xf32>
    %32 = tpu.matmul %30, %31, %cst_19 {dimension_numbers = #tpu.dot_dimension_numbers<[1], [1], [0], [0], [0, 0, 1, 0], [], []>} : vector<8x256xbf16>, vector<128x256xbf16>, vector<8x128xf32> -> vector<8x128xf32>
    %33 = tpu.reciprocal %29 {approx = true} : vector<128x1xf32> -> vector<128x1xf32>
    %34 = tpu.transpose %33, [1, 0] : vector<128x1xf32> -> vector<1x128xf32>
    %35 = vector.broadcast %34 : vector<1x128xf32> to vector<8x128xf32>
    %36 = arith.mulf %32, %35 : vector<8x128xf32>
    %c0_20 = arith.constant 0 : index
    %c0_21 = arith.constant 0 : index
    %37 = vector.load %arg6[%c0_20, %c0_21] : memref<16x8xbf16, #tpu.memory_space<vmem>>, vector<8x8xbf16>
    %38 = arith.truncf %36 : vector<8x128xf32> to vector<8x128xbf16>
    %cst_22 = arith.constant dense<0.000000e+00> : vector<8x128xf32>
    %39 = tpu.matmul %37, %38, %cst_22 {dimension_numbers = #tpu.dot_dimension_numbers<[0], [0], [1], [1], [0, 1, 1, 1], [], []>} : vector<8x8xbf16>, vector<8x128xbf16>, vector<8x128xf32> -> vector<8x128xf32>
    %40 = arith.addf %17, %39 : vector<8x128xf32>
    %41 = vector.extract_strided_slice %8 {offsets = [8, 0], sizes = [8, 128], strides = [1, 1]} : vector<16x128xf32> to vector<8x128xf32>
    %42 = arith.truncf %41 : vector<8x128xf32> to vector<8x128xbf16>
    %43 = vector.extract_strided_slice %12 {offsets = [8, 0], sizes = [8, 256], strides = [1, 1]} : vector<16x256xbf16> to vector<8x256xbf16>
    %cst_23 = arith.constant dense<0.000000e+00> : vector<128x256xf32>
    %44 = tpu.matmul %42, %43, %cst_23 {dimension_numbers = #tpu.dot_dimension_numbers<[0], [0], [1], [1], [0, 1, 1, 1], [], []>} : vector<8x128xbf16>, vector<8x256xbf16>, vector<128x256xf32> -> vector<128x256xf32>
    %45 = arith.addf %44, %16 : vector<128x256xf32>
    %cst_24 = arith.constant dense<0xFF800000> : vector<128xf32>
    %46 = vector.multi_reduction <maximumf>, %45, %cst_24 [1] : vector<128x256xf32> to vector<128xf32>
    %47 = vector.shape_cast %46 : vector<128xf32> to vector<128x1xf32>
    %48 = vector.broadcast %47 : vector<128x1xf32> to vector<128x256xf32>
    %49 = arith.subf %45, %48 : vector<128x256xf32>
    %50 = math.exp %49 : vector<128x256xf32>
    %cst_25 = arith.constant dense<0.000000e+00> : vector<128xf32>
    %51 = vector.multi_reduction <add>, %50, %cst_25 [1] : vector<128x256xf32> to vector<128xf32>
    %52 = vector.shape_cast %51 : vector<128xf32> to vector<128x1xf32>
    %53 = vector.extract_strided_slice %14 {offsets = [8, 0], sizes = [8, 256], strides = [1, 1]} : vector<16x256xbf16> to vector<8x256xbf16>
    %54 = arith.truncf %50 : vector<128x256xf32> to vector<128x256xbf16>
    %cst_26 = arith.constant dense<0.000000e+00> : vector<8x128xf32>
    %55 = tpu.matmul %53, %54, %cst_26 {dimension_numbers = #tpu.dot_dimension_numbers<[1], [1], [0], [0], [0, 0, 1, 0], [], []>} : vector<8x256xbf16>, vector<128x256xbf16>, vector<8x128xf32> -> vector<8x128xf32>
    %56 = tpu.reciprocal %52 {approx = true} : vector<128x1xf32> -> vector<128x1xf32>
    %57 = tpu.transpose %56, [1, 0] : vector<128x1xf32> -> vector<1x128xf32>
    %58 = vector.broadcast %57 : vector<1x128xf32> to vector<8x128xf32>
    %59 = arith.mulf %55, %58 : vector<8x128xf32>
    %c8 = arith.constant 8 : index
    %c0_27 = arith.constant 0 : index
    %60 = vector.load %arg6[%c8, %c0_27] : memref<16x8xbf16, #tpu.memory_space<vmem>>, vector<8x8xbf16>
    %61 = arith.truncf %59 : vector<8x128xf32> to vector<8x128xbf16>
    %cst_28 = arith.constant dense<0.000000e+00> : vector<8x128xf32>
    %62 = tpu.matmul %60, %61, %cst_28 {dimension_numbers = #tpu.dot_dimension_numbers<[0], [0], [1], [1], [0, 1, 1, 1], [], []>} : vector<8x8xbf16>, vector<8x128xbf16>, vector<8x128xf32> -> vector<8x128xf32>
    %63 = arith.addf %40, %62 : vector<8x128xf32>
    %64 = arith.truncf %63 : vector<8x128xf32> to vector<8x128xbf16>
    %c0_29 = arith.constant 0 : index
    %c0_30 = arith.constant 0 : index
    %c0_31 = arith.constant 0 : index
    %65 = vector.load %arg9[%c0_29, %c0_30, %c0_31] : memref<1x8x128xbf16, #tpu.memory_space<vmem>>, vector<1x8x128xbf16>
    %66 = vector.shape_cast %65 : vector<1x8x128xbf16> to vector<8x128xbf16>
    %67 = vector.shape_cast %64 : vector<8x128xbf16> to vector<1x8x128xbf16>
    tpu.vector_store %arg9[%c0_29, %c0_30, %c0_31], %67 {strides = array<i32>} : memref<1x8x128xbf16, #tpu.memory_space<vmem>>, vector<1x8x128xbf16>,
    return
  }
  func.func @transform_0(%arg0: i32, %arg1: i32) -> (i32, i32, i32) {
    %c0_i32 = arith.constant 0 : i32
    %c0_i32_0 = arith.constant 0 : i32
    %c0_i32_1 = arith.constant 0 : i32
    return %arg1, %c0_i32, %c0_i32_0 : i32, i32, i32
  }
  func.func @transform_1(%arg0: i32, %arg1: i32) -> (i32, i32) {
    %c0_i32 = arith.constant 0 : i32
    %c0_i32_0 = arith.constant 0 : i32
    %c0_i32_1 = arith.constant 0 : i32
    return %c0_i32, %c0_i32_0 : i32, i32
  }
  func.func @transform_2(%arg0: i32, %arg1: i32) -> (i32, i32) {
    %c0_i32 = arith.constant 0 : i32
    %c0_i32_0 = arith.constant 0 : i32
    %c0_i32_1 = arith.constant 0 : i32
    return %c0_i32, %c0_i32_0 : i32, i32
  }
  func.func @transform_3(%arg0: i32, %arg1: i32) -> (i32, i32) {
    %c0_i32 = arith.constant 0 : i32
    %c0_i32_0 = arith.constant 0 : i32
    %c0_i32_1 = arith.constant 0 : i32
    return %c0_i32, %c0_i32_0 : i32, i32
  }
  func.func @transform_4(%arg0: i32, %arg1: i32) -> (i32, i32) {
    %c0_i32 = arith.constant 0 : i32
    %c0_i32_0 = arith.constant 0 : i32
    %c0_i32_1 = arith.constant 0 : i32
    return %c0_i32, %c0_i32_0 : i32, i32
  }
  func.func @transform_5(%arg0: i32, %arg1: i32) -> (i32, i32, i32) {
    %c0_i32 = arith.constant 0 : i32
    %c0_i32_0 = arith.constant 0 : i32
    return %arg0, %c0_i32, %arg1 : i32, i32, i32
  }
  func.func @transform_6(%arg0: i32, %arg1: i32) -> (i32, i32, i32) {
    %c0_i32 = arith.constant 0 : i32
    %c0_i32_0 = arith.constant 0 : i32
    %c0_i32_1 = arith.constant 0 : i32
    return %arg0, %c0_i32, %c0_i32_0 : i32, i32, i32
  }
  func.func @transform_7(%arg0: i32, %arg1: i32) -> (i32, i32, i32) {
    %c0_i32 = arith.constant 0 : i32
    %c0_i32_0 = arith.constant 0 : i32
    return %arg0, %c0_i32, %arg1 : i32, i32, i32
  }
}

</mosaic_0001>

<llo_original>
// kernel: tpu_custom_call.1
$region0: #{tpu_custom_call.1}
  #allocation0 [shape = 'u32[]', space=smem, size = 0x4, offset = 0x4, fixed_abs, tag = 'smem constant byte address 0x4 - core index']
  #allocation1 [shape = 'u32[144,128]{1,0:T(1,128)}', space=vmem, size = 0x12000, scoped, tag = 'internal scratch']
  %s0 = inlined_call_operand.hbm [shape: f32[2,128,256], index: 0, kind: input, shape index: {}]
  %s1 = inlined_call_operand.vmem [shape: bf16[16,4], index: 1, kind: input, shape index: {}]
  %s2 = inlined_call_operand.vmem [shape: f32[16,1], index: 2, kind: input, shape index: {}]
  %s3 = inlined_call_operand.vmem [shape: bf16[32,4], index: 3, kind: input, shape index: {}]
  %s4 = inlined_call_operand.vmem [shape: bf16[16,8], index: 4, kind: input, shape index: {}]
  %s5 = inlined_call_operand.vmem [shape: bf16[2,4,256], index: 5, kind: input, shape index: {}]
  %s6 = inlined_call_operand.vmem [shape: bf16[2,4,256], index: 6, kind: input, shape index: {}]
  %s7 = inlined_call_operand.hbm [shape: bf16[2,8,256], index: 7, kind: output, shape index: {}]
  %s8 = sld [smem:[#allocation0]]
  $region65: #{tpu_custom_call.1} parent=0
    _
  %s10 = ssub.s32 1, %s8
  %s11 = scalar_select 0, %s10, %s8
  $region1: #{tpu_custom_call.1} parent=0
    #allocation2 [shape = 'u8[262144]{0}', space=vmem, size = 0x40000, scoped, tag = 'input window, operand 0']
    #allocation3 [shape = 's32[2]{0}', space=sflag, size = 0x8, scoped, tag = 'scoped memory for tpu_custom_call.1']
    #allocation4 [shape = 's32[2]{0}', space=sflag, size = 0x8, scoped, tag = 'scoped memory for tpu_custom_call.1']
    #allocation5 [shape = 'u8[4096]{0}', space=vmem, size = 0x1000, scoped, tag = 'output window, operand 0']
    %12 = vsyncpa [#allocation3], 0
    %s13 = scalar_lea.sflag [#allocation3], 1
    %14 = vsyncpa %s13, 0
    %15 = vsyncpa [#allocation4], 0
    %s16 = scalar_lea.sflag [#allocation4], 1
    %17 = vsyncpa %s16, 0
    loop: start=0, step=1, limit=6
    $region2: #{tpu_custom_call.1} parent=1 // loop_pre_header
      _
    $region3: #{tpu_custom_call.1} parent=1 // loop_header
      %s19 = sphi 0, %s23
      %p20 = scmp.ge.s32.totalorder %s19, 6
      %s26 = sphi 0, %s38
      %s27 = sphi 0, %s34
      %s28 = sphi 0, %s26
      %s29 = sphi 0, %s27
      %s30 = sphi 0, %s28
      %s31 = sphi 0, %s29
      %s41 = sphi 0, %s43
      %s44 = sphi 0, %s41
      %s45 = sphi 0, %s44
      %s61 = sphi 0, %s45
      %s65 = sphi 0, %s65
      %s67 = sphi 0, %s65
      %s68 = sphi 0, %s67
      %s82 = sphi 0, %s68
      %s86 = sphi 0, %s86
      %s88 = sphi 0, %s86
      %s89 = sphi 0, %s88
      %s103 = sphi 0, %s89
      %s107 = sphi 0, %s107
      %s109 = sphi 0, %s107
      %s110 = sphi 0, %s109
      %s124 = sphi 0, %s110
      %s128 = sphi 0, %s128
      %s130 = sphi 0, %s128
      %s131 = sphi 0, %s130
      %s145 = sphi 0, %s131
      %s153 = sphi 0, %s155
      %s156 = sphi 0, %s153
      %s157 = sphi 0, %s156
      %s173 = sphi 0, %s157
      %s179 = sphi 0, %s181
      %s182 = sphi 0, %s179
      %s183 = sphi 0, %s182
      %s199 = sphi 0, %s183
      %s207 = sphi 0, %s209
      %s210 = sphi 0, %s207
      %s211 = sphi 0, %s210
      %s227 = sphi 0, %s211
    $region4: #{tpu_custom_call.1} parent=1 // loop_header_branch
      %22 = sbr.rel (%p20) target = $region8
    $region5: #{tpu_custom_call.1} parent=1 // loop_body
      %s24 = ssub.s32 %s19, 1
      %s25 = ssub.s32 %s19, 2
      %s32 = sadd.s32 1, %s27
      %p33 = scmp.ge.s32.totalorder %s32, 2
      %s34 = scalar_select %p33, 0, %s32
      %s35 = sadd.s32 1, %s26
      %s36 = scalar_select %p33, %s35, %s26
      %p37 = scmp.ge.s32.totalorder %s36, 2
      %s38 = scalar_select %p37, 0, %s36
      %s39 = ssub.s32 %s27, %s34
      %p40 = scmp.eq.s32.totalorder %s39, 0
      %s42 = sadd.s32 %s41, 1
      %s43 = scalar_select %p40, %s41, %s42
      %p46 = pneg %p40
      %p47 = scmp.eq.s32.totalorder %s19, 3
      %p48 = por %p46, %p47
      %p49 = scmp.ne.s32.totalorder %s41, %s44
      %p50 = scmp.eq.s32.totalorder %s19, 0
      %p51 = por %p49, %p50
      %p52 = scmp.ne.s32.totalorder %s41, %s44
      %p53 = scmp.eq.s32.totalorder %s24, 3
      %p54 = por %p52, %p53
      %p55 = scmp.ne.s32.totalorder %s44, %s45
      %p56 = scmp.eq.s32.totalorder %s24, 0
      %p57 = por %p55, %p56
      %p58 = scmp.ne.s32.totalorder %s44, %s45
      %p59 = scmp.eq.s32.totalorder %s25, 3
      %p60 = por %p58, %p59
      %p62 = scmp.ne.s32.totalorder %s45, %s61
      %p63 = scmp.eq.s32.totalorder %s25, 0
      %p64 = por %p62, %p63
      %s66 = sadd.s32 %s65, 1
      %p69 = scmp.eq.s32.totalorder %s19, 3
      %p70 = scmp.ne.s32.totalorder %s65, %s67
      %p71 = scmp.eq.s32.totalorder %s19, 0
      %p72 = por %p70, %p71
      %p73 = scmp.ne.s32.totalorder %s65, %s67
      %p74 = scmp.eq.s32.totalorder %s24, 3
      %p75 = por %p73, %p74
      %p76 = scmp.ne.s32.totalorder %s67, %s68
      %p77 = scmp.eq.s32.totalorder %s24, 0
      %p78 = por %p76, %p77
      %p79 = scmp.ne.s32.totalorder %s67, %s68
      %p80 = scmp.eq.s32.totalorder %s25, 3
      %p81 = por %p79, %p80
      %p83 = scmp.ne.s32.totalorder %s68, %s82
      %p84 = scmp.eq.s32.totalorder %s25, 0
      %p85 = por %p83, %p84
      %s87 = sadd.s32 %s86, 1
      %p90 = scmp.eq.s32.totalorder %s19, 3
      %p91 = scmp.ne.s32.totalorder %s86, %s88
      %p92 = scmp.eq.s32.totalorder %s19, 0
      %p93 = por %p91, %p92
      %p94 = scmp.ne.s32.totalorder %s86, %s88
      %p95 = scmp.eq.s32.totalorder %s24, 3
      %p96 = por %p94, %p95
      %p97 = scmp.ne.s32.totalorder %s88, %s89
      %p98 = scmp.eq.s32.totalorder %s24, 0
      %p99 = por %p97, %p98
      %p100 = scmp.ne.s32.totalorder %s88, %s89
      %p101 = scmp.eq.s32.totalorder %s25, 3
      %p102 = por %p100, %p101
      %p104 = scmp.ne.s32.totalorder %s89, %s103
      %p105 = scmp.eq.s32.totalorder %s25, 0
      %p106 = por %p104, %p105
      %s108 = sadd.s32 %s107, 1
      %p111 = scmp.eq.s32.totalorder %s19, 3
      %p112 = scmp.ne.s32.totalorder %s107, %s109
      %p113 = scmp.eq.s32.totalorder %s19, 0
      %p114 = por %p112, %p113
      %p115 = scmp.ne.s32.totalorder %s107, %s109
      %p116 = scmp.eq.s32.totalorder %s24, 3
      %p117 = por %p115, %p116
      %p118 = scmp.ne.s32.totalorder %s109, %s110
      %p119 = scmp.eq.s32.totalorder %s24, 0
      %p120 = por %p118, %p119
      %p121 = scmp.ne.s32.totalorder %s109, %s110
      %p122 = scmp.eq.s32.totalorder %s25, 3
      %p123 = por %p121, %p122
      %p125 = scmp.ne.s32.totalorder %s110, %s124
      %p126 = scmp.eq.s32.totalorder %s25, 0
      %p127 = por %p125, %p126
      %s129 = sadd.s32 %s128, 1
      %p132 = scmp.eq.s32.totalorder %s19, 3
      %p133 = scmp.ne.s32.totalorder %s128, %s130
      %p134 = scmp.eq.s32.totalorder %s19, 0
      %p135 = por %p133, %p134
      %p136 = scmp.ne.s32.totalorder %s128, %s130
      %p137 = scmp.eq.s32.totalorder %s24, 3
      %p138 = por %p136, %p137
      %p139 = scmp.ne.s32.totalorder %s130, %s131
      %p140 = scmp.eq.s32.totalorder %s24, 0
      %p141 = por %p139, %p140
      %p142 = scmp.ne.s32.totalorder %s130, %s131
      %p143 = scmp.eq.s32.totalorder %s25, 3
      %p144 = por %p142, %p143
      %p146 = scmp.ne.s32.totalorder %s131, %s145
      %p147 = scmp.eq.s32.totalorder %s25, 0
      %p148 = por %p146, %p147
      %s149 = ssub.s32 %s26, %s38
      %s150 = ssub.s32 %s27, %s34
      %s151 = sor.u32 %s149, %s150
      %p152 = scmp.eq.s32.totalorder %s151, 0
      %s154 = sadd.s32 %s153, 1
      %s155 = scalar_select %p152, %s153, %s154
      %p158 = pneg %p152
      %p159 = scmp.eq.s32.totalorder %s19, 3
      %p160 = por %p158, %p159
      %p161 = scmp.ne.s32.totalorder %s153, %s156
      %p162 = scmp.eq.s32.totalorder %s19, 0
      %p163 = por %p161, %p162
      %p164 = scmp.ne.s32.totalorder %s153, %s156
      %p165 = scmp.eq.s32.totalorder %s24, 3
      %p166 = por %p164, %p165
      %p167 = scmp.ne.s32.totalorder %s156, %s157
      %p168 = scmp.eq.s32.totalorder %s24, 0
      %p169 = por %p167, %p168
      %p170 = scmp.ne.s32.totalorder %s156, %s157
      %p171 = scmp.eq.s32.totalorder %s25, 3
      %p172 = por %p170, %p171
      %p174 = scmp.ne.s32.totalorder %s157, %s173
      %p175 = scmp.eq.s32.totalorder %s25, 0
      %p176 = por %p174, %p175
      %s177 = ssub.s32 %s26, %s38
      %p178 = scmp.eq.s32.totalorder %s177, 0
      %s180 = sadd.s32 %s179, 1
      %s181 = scalar_select %p178, %s179, %s180
      %p184 = pneg %p178
      %p185 = scmp.eq.s32.totalorder %s19, 3
      %p186 = por %p184, %p185
      %p187 = scmp.ne.s32.totalorder %s179, %s182
      %p188 = scmp.eq.s32.totalorder %s19, 0
      %p189 = por %p187, %p188
      %p190 = scmp.ne.s32.totalorder %s179, %s182
      %p191 = scmp.eq.s32.totalorder %s24, 3
      %p192 = por %p190, %p191
      %p193 = scmp.ne.s32.totalorder %s182, %s183
      %p194 = scmp.eq.s32.totalorder %s24, 0
      %p195 = por %p193, %p194
      %p196 = scmp.ne.s32.totalorder %s182, %s183
      %p197 = scmp.eq.s32.totalorder %s25, 3
      %p198 = por %p196, %p197
      %p200 = scmp.ne.s32.totalorder %s183, %s199
      %p201 = scmp.eq.s32.totalorder %s25, 0
      %p202 = por %p200, %p201
      %s203 = ssub.s32 %s26, %s38
      %s204 = ssub.s32 %s27, %s34
      %s205 = sor.u32 %s203, %s204
      %p206 = scmp.eq.s32.totalorder %s205, 0
      %s208 = sadd.s32 %s207, 1
      %s209 = scalar_select %p206, %s207, %s208
      %p212 = pneg %p206
      %p213 = scmp.eq.s32.totalorder %s19, 3
      %p214 = por %p212, %p213
      %p215 = scmp.ne.s32.totalorder %s207, %s210
      %p216 = scmp.eq.s32.totalorder %s19, 0
      %p217 = por %p215, %p216
      %p218 = scmp.ne.s32.totalorder %s207, %s210
      %p219 = scmp.eq.s32.totalorder %s24, 3
      %p220 = por %p218, %p219
      %p221 = scmp.ne.s32.totalorder %s210, %s211
      %p222 = scmp.eq.s32.totalorder %s24, 0
      %p223 = por %p221, %p222
      %p224 = scmp.ne.s32.totalorder %s210, %s211
      %p225 = scmp.eq.s32.totalorder %s25, 3
      %p226 = por %p224, %p225
      %p228 = scmp.ne.s32.totalorder %s211, %s227
      %p229 = scmp.eq.s32.totalorder %s25, 0
      %p230 = por %p228, %p229
      %p231 = scmp.le.s32.totalorder 1, %s19
      %p232 = scmp.lt.s32.totalorder %s19, 5
      %p233 = pnand %p231, %p232
      %p234 = pneg %p233
      // Predicated region
      $region9: #{tpu_custom_call.1} parent=5 // pred_check
        _
      $region10: #{tpu_custom_call.1} parent=5 // pred_check_branch
        %236 = sbr.rel (%p233) target = $region12
      $region11: #{tpu_custom_call.1} parent=5 // pred_region
        %s237 = ssub.s32 %s19, 1
        // Predicated region
        $region13: #{tpu_custom_call.1} parent=11 // pred_check
          %p238 = pneg %p78
        $region14: #{tpu_custom_call.1} parent=11 // pred_check_branch
          %240 = sbr.rel (%p238) target = $region16
        $region15: #{tpu_custom_call.1} parent=11 // pred_region
          _
        $region16: #{tpu_custom_call.1} parent=11 // pred_fallthru
          _
        // Predicated region
        $region17: #{tpu_custom_call.1} parent=11 // pred_check
          %p241 = pneg %p99
        $region18: #{tpu_custom_call.1} parent=11 // pred_check_branch
          %243 = sbr.rel (%p241) target = $region20
        $region19: #{tpu_custom_call.1} parent=11 // pred_region
          _
        $region20: #{tpu_custom_call.1} parent=11 // pred_fallthru
          _
        // Predicated region
        $region21: #{tpu_custom_call.1} parent=11 // pred_check
          %p244 = pneg %p120
        $region22: #{tpu_custom_call.1} parent=11 // pred_check_branch
          %246 = sbr.rel (%p244) target = $region24
        $region23: #{tpu_custom_call.1} parent=11 // pred_region
          _
        $region24: #{tpu_custom_call.1} parent=11 // pred_fallthru
          _
        // Predicated region
        $region25: #{tpu_custom_call.1} parent=11 // pred_check
          %p247 = pneg %p141
        $region26: #{tpu_custom_call.1} parent=11 // pred_check_branch
          %249 = sbr.rel (%p247) target = $region28
        $region27: #{tpu_custom_call.1} parent=11 // pred_region
          _
        $region28: #{tpu_custom_call.1} parent=11 // pred_fallthru
          _
      $region12: #{tpu_custom_call.1} parent=5 // pred_fallthru
        _
      %p250 = scmp.lt.s32.totalorder %s19, 4
      // Predicated region
      $region29: #{tpu_custom_call.1} parent=5 // pred_check
        %p251 = pneg %p250
      $region30: #{tpu_custom_call.1} parent=5 // pred_check_branch
        %253 = sbr.rel (%p251) target = $region32
      $region31: #{tpu_custom_call.1} parent=5 // pred_region
        // Predicated region
        $region33: #{tpu_custom_call.1} parent=31 // pred_check
          %p254 = pneg %p51
        $region34: #{tpu_custom_call.1} parent=31 // pred_check_branch
          %256 = sbr.rel (%p254) target = $region36
        $region35: #{tpu_custom_call.1} parent=31 // pred_region
          %s257 = sand.u32 %s41, 1
          %s258 = scalar_lea.sflag [#allocation3], %s257
          %s259 = sand.u32 %s41, 1
          %s260 = smul.addr %s259, 256
          %s261 = scalar_lea.vmem [#allocation2], %s260
          %s263 = ssub.s32 4096, 4096
          %264 = vsyncadd %s258, %s263
          %s265 = smul.addr %s27, 32
          %s266 = smul.addr %s265, 128
          %s267 = scalar_lea.hbm %s0, %s266
          %s268 = sshll.u32 %s261, 4
          %s269 = int_to_ptr.vmem [resolvable:$true] %s268
          %274 = dma.hbm_to_vmem [thread:$0]  %s267, 4096, %s269, %s258, 256, 256, 16
        $region36: #{tpu_custom_call.1} parent=31 // pred_fallthru
          _
        // Predicated region
        $region37: #{tpu_custom_call.1} parent=31 // pred_check
          %p275 = pneg %p163
        $region38: #{tpu_custom_call.1} parent=31 // pred_check_branch
          %277 = sbr.rel (%p275) target = $region40
        $region39: #{tpu_custom_call.1} parent=31 // pred_region
          %p278 = scmp.lt.s32.totalorder %s26, 1
          %s279 = scalar_select %p278, %s26, 1
          %p280 = scmp.lt.s32.totalorder %s27, 1
          %s281 = scalar_select %p280, %s27, 1
          %s282 = smul.addr %s279, 2
          %s283 = sadd.s32 %s281, %s282
          %s284 = smul.addr %s283, 2
          %s285 = scalar_lea.vmem %s5, %s284
        $region40: #{tpu_custom_call.1} parent=31 // pred_fallthru
          _
        // Predicated region
        $region41: #{tpu_custom_call.1} parent=31 // pred_check
          %p286 = pneg %p189
        $region42: #{tpu_custom_call.1} parent=31 // pred_check_branch
          %288 = sbr.rel (%p286) target = $region44
        $region43: #{tpu_custom_call.1} parent=31 // pred_region
          %p289 = scmp.lt.s32.totalorder %s26, 1
          %s290 = scalar_select %p289, %s26, 1
          %s291 = smul.addr %s290, 2
          %s292 = smul.addr %s291, 2
          %s293 = scalar_lea.vmem %s6, %s292
        $region44: #{tpu_custom_call.1} parent=31 // pred_fallthru
          _
      $region32: #{tpu_custom_call.1} parent=5 // pred_fallthru
        _
      %p294 = scmp.le.s32.totalorder 1, %s19
      %p295 = scmp.lt.s32.totalorder %s19, 5
      %p296 = pnand %p294, %p295
      %p297 = pneg %p296
      // Predicated region
      $region45: #{tpu_custom_call.1} parent=5 // pred_check
        _
      $region46: #{tpu_custom_call.1} parent=5 // pred_check_branch
        %299 = sbr.rel (%p296) target = $region48
      $region47: #{tpu_custom_call.1} parent=5 // pred_region
        %s300 = ssub.s32 %s19, 1
        %s301 = sand.u32 %s44, 1
        %s302 = scalar_lea.sflag [#allocation3], %s301
        %s303 = sand.u32 %s44, 1
        %s304 = smul.addr %s303, 256
        %s305 = scalar_lea.vmem [#allocation2], %s304
        // Predicated region
        $region49: #{tpu_custom_call.1} parent=47 // pred_check
          %p306 = pneg %p57
        $region50: #{tpu_custom_call.1} parent=47 // pred_check_branch
          %308 = sbr.rel (%p306) target = $region52
        $region51: #{tpu_custom_call.1} parent=47 // pred_region
          %309 = dma.done %s302, 4096
        $region52: #{tpu_custom_call.1} parent=47 // pred_fallthru
          _
        %s310 = sand.u32 %s44, 1
        %s311 = scalar_lea.sflag [#allocation3], %s310
        %s312 = sand.u32 %s44, 1
        %s313 = smul.addr %s312, 256
        %s314 = scalar_lea.vmem [#allocation2], %s313
        %p315 = pneg %p57
        %p316 = pneg %p54
        %p317 = pneg %p78
        %p318 = pneg %p75
        %p319 = pneg %p99
        %p320 = pneg %p96
        %p321 = pneg %p120
        %p322 = pneg %p117
        %p323 = pneg %p141
        %p324 = pneg %p138
        %p325 = scmp.lt.s32.totalorder %s28, 1
        %s326 = scalar_select %p325, %s28, 1
        %p327 = scmp.lt.s32.totalorder %s29, 1
        %s328 = scalar_select %p327, %s29, 1
        %s329 = smul.addr %s326, 2
        %s330 = sadd.s32 %s328, %s329
        %s331 = smul.addr %s330, 2
        %s332 = scalar_lea.vmem %s5, %s331
        %p333 = pneg %p169
        %p334 = pneg %p166
        %p335 = scmp.lt.s32.totalorder %s28, 1
        %s336 = scalar_select %p335, %s28, 1
        %s337 = smul.addr %s336, 2
        %s338 = smul.addr %s337, 2
        %s339 = scalar_lea.vmem %s6, %s338
        %p340 = pneg %p195
        %p341 = pneg %p192
        %p342 = pneg %p223
        %p343 = pneg %p220
        %s344 = sand.u32 %s210, 1
        %s345 = scalar_lea.sflag [#allocation4], %s344
        %s346 = sand.u32 %s210, 1
        %s347 = smul.addr %s346, 4
        %s348 = scalar_lea.vmem [#allocation5], %s347
        %p349 = scmp.lt.s32.totalorder %s28, 1
        %s350 = scalar_select %p349, %s28, 1
        %p351 = scmp.lt.s32.totalorder %s29, 1
        %s352 = scalar_select %p351, %s29, 1
        %s353 = smul.addr %s350, 2
        %s354 = sadd.s32 %s352, %s353
        %s355 = smul.addr %s354, 2
        %s356 = scalar_lea.vmem %s5, %s355
        %p357 = scmp.lt.s32.totalorder %s28, 1
        %s358 = scalar_select %p357, %s28, 1
        %s359 = smul.addr %s358, 2
        %s360 = smul.addr %s359, 2
        %s361 = scalar_lea.vmem %s6, %s360
        %v363 = vld [vmem:[%s356] sm:$0x3]
        %v364 = vld [vmem:[%s361] sm:$0xf]
        %v365 = vld [vmem:[%s1] sm:$0xf]
        %v366 = vld [vmem:[%s1 + $0x4] sm:$0xf]
        %v367 = vld [vmem:[%s2] sm:$0xff]
        %v368 = vld [vmem:[%s2 + $0x8] sm:$0xff]
        %370 = vset.pattern.permute.xlu0 0
        %371 = vperm.xlu0 %370, %v367
        %v372 = vpop.permute.xlu0 %371
        %375 = vset.pattern.permute.xlu0 0
        %376 = vperm.xlu0 %375, %v368
        %v377 = vpop.permute.xlu0 %376
        %v381 = vunpack.c.l.b16 %v365
        %v382 = vunpack.c.l.b16 %v366
        %v383 = vpack.c.b16 %v382, %v381
        %vm384 = vcmask 31744
        %v386 = vsel %vm384, %v383, 0
        %vm388 = vcmask 1041408
        %v390 = vsel %vm388, %v363, 0
        %392 = vmatprep.subr.bf16.mxu0 0
        %393 = vmatpush1.bf16.msra.mxu0 0
        %394 = vmatprep.subr.bf16.mxu0 0
        %395 = vmatpush1.bf16.msra.mxu0 0
        %396 = vmatprep.subr.bf16.mxu0 0
        %397 = vmatpush1.bf16.msra.mxu0 0
        %398 = vmatprep.subr.bf16.mxu0 0
        %399 = vmatpush1.bf16.msra.mxu0 0
        %400 = vmatprep.subr.bf16.mxu0 0
        %401 = vmatpush1.bf16.msra.mxu0 0
        %402 = vmatprep.subr.bf16.mxu0 0
        %403 = vmatpush1.bf16.msra.mxu0 0
        %404 = vmatprep.subr.bf16.mxu0 0
        %405 = vmatpush1.bf16.msra.mxu0 0
        %406 = vmatprep.subr.bf16.mxu0 0
        %407 = vmatpush1.bf16.msra.mxu0 %v390
        %408 = vmatprep.subr.bf16.mxu0 0
        %409 = vmatpush2.bf16.msra.mxu0 0
        %410 = vmatprep.subr.bf16.mxu0 0
        %411 = vmatpush2.bf16.msra.mxu0 0
        %412 = vmatprep.subr.bf16.mxu0 0
        %413 = vmatpush2.bf16.msra.mxu0 0
        %414 = vmatprep.subr.bf16.mxu0 0
        %415 = vmatpush2.bf16.msra.mxu0 0
        %416 = vmatprep.subr.bf16.mxu0 0
        %417 = vmatpush2.bf16.msra.mxu0 0
        %418 = vmatprep.subr.bf16.mxu0 0
        %419 = vmatpush2.bf16.msra.mxu0 0
        %420 = vmatprep.subr.bf16.mxu0 0
        %421 = vmatpush2.bf16.msra.mxu0 0
        %422 = vmatprep.subr.bf16.mxu0 0
        %423 = vmatpush2.bf16.msra.mxu0 0
        %424 = vmatprep.mubr.bf16.mxu0 0
        %425 = vmatmul.mubr.bf16.gmra.mxu0 %v386
        %v426 = vpop.f32.mrf.mxu0
        %v427 = vadd.f32 %v372, %v426
        %v428 = vpop.f32.mrf.mxu0
        %v429 = vpop.f32.mrf.mxu0
        %v430 = vadd.f32 %v377, %v429
        %v431 = vpop.f32.mrf.mxu0
        %432 = vdwg.mxu0
        %v433 = vld [vmem:[%s3] sm:$0xf]
        %v434 = vld [vmem:[%s3 + $0x4] sm:$0xf]
        %v435 = vld [vmem:[%s3 + $0x8] sm:$0xf]
        %v436 = vld [vmem:[%s3 + $0xc] sm:$0xf]
        %v441 = vunpack.c.l.b16 %v433
        %v442 = vunpack.c.l.b16 %v434
        %v443 = vunpack.c.l.b16 %v435
        %v444 = vunpack.c.l.b16 %v436
        %v445 = vpack.c.b16 %v442, %v441
        %v446 = vpack.c.b16 %v444, %v443
        %v449 = vunpack.c.l.s4 1983009808
        %v450 = vunpack.c.0.s8 %v449
        %v451 = vlaneseq
        %v452 = vshrl.u32 %v451, 7
        %v453 = vsub.s32 %v450, %v452
        %v454 = vrot.slane %v364, %v453
        %v455 = vcombine.high %v454, %v454
        %v457 = vsel %vm384, %v445, 0
        %v460 = vsel %vm384, %v446, 0
        %v463 = vsel %vm388, %v454, 0
        %v466 = vsel %vm388, %v455, 0
        %468 = vmatprep.subr.bf16.mxu0 0
        %469 = vmatpush1.bf16.msra.mxu0 0
        %470 = vmatprep.subr.bf16.mxu0 0
        %471 = vmatpush1.bf16.msra.mxu0 0
        %472 = vmatprep.subr.bf16.mxu0 0
        %473 = vmatpush1.bf16.msra.mxu0 0
        %474 = vmatprep.subr.bf16.mxu0 0
        %475 = vmatpush1.bf16.msra.mxu0 0
        %476 = vmatprep.subr.bf16.mxu0 0
        %477 = vmatpush1.bf16.msra.mxu0 0
        %478 = vmatprep.subr.bf16.mxu0 0
        %479 = vmatpush1.bf16.msra.mxu0 0
        %480 = vmatprep.subr.bf16.mxu0 0
        %481 = vmatpush1.bf16.msra.mxu0 0
        %482 = vmatprep.subr.bf16.mxu0 %v466
        %483 = vmatpush1.bf16.msra.mxu0 %v463
        %484 = vmatprep.subr.bf16.mxu0 0
        %485 = vmatpush2.bf16.msra.mxu0 0
        %486 = vmatprep.subr.bf16.mxu0 0
        %487 = vmatpush2.bf16.msra.mxu0 0
        %488 = vmatprep.subr.bf16.mxu0 0
        %489 = vmatpush2.bf16.msra.mxu0 0
        %490 = vmatprep.subr.bf16.mxu0 0
        %491 = vmatpush2.bf16.msra.mxu0 0
        %492 = vmatprep.subr.bf16.mxu0 0
        %493 = vmatpush2.bf16.msra.mxu0 0
        %494 = vmatprep.subr.bf16.mxu0 0
        %495 = vmatpush2.bf16.msra.mxu0 0
        %496 = vmatprep.subr.bf16.mxu0 0
        %497 = vmatpush2.bf16.msra.mxu0 0
        %498 = vmatprep.subr.bf16.mxu0 0
        %499 = vmatpush2.bf16.msra.mxu0 0
        %500 = vmatprep.mubr.bf16.mxu0 0
        %501 = vmatmul.mubr.bf16.gmra.mxu0 %v457
        %v502 = vpop.f32.mrf.mxu0
        %v503 = vadd.f32 0.0, %v502
        %v504 = vpop.f32.mrf.mxu0
        %v505 = vadd.f32 0.0, %v504
        %v506 = vpop.f32.mrf.mxu0
        %v507 = vadd.f32 0.0, %v506
        %v508 = vpop.f32.mrf.mxu0
        %v509 = vadd.f32 0.0, %v508
        %510 = vmatprep.mubr.bf16.mxu0 0
        %511 = vmatmul.mubr.bf16.gmra.mxu0 %v460
        %v512 = vpop.f32.mrf.mxu0
        %v513 = vadd.f32 0.0, %v512
        %v514 = vpop.f32.mrf.mxu0
        %v515 = vadd.f32 0.0, %v514
        %v516 = vpop.f32.mrf.mxu0
        %v517 = vadd.f32 0.0, %v516
        %v518 = vpop.f32.mrf.mxu0
        %v519 = vadd.f32 0.0, %v518
        %520 = vdwg.mxu0
        %v521 = vpack.c.bf16 %v507, %v503
        %v522 = vpack.c.bf16 %v509, %v505
        %v523 = vpack.c.bf16 %v517, %v513
        %v524 = vpack.c.bf16 %v519, %v515
        %v525 = vld [vmem:[%s305] sm:$0xff]
        %v526 = vld [vmem:[%s305 + $0x8] sm:$0xff]
        %v527 = vld [vmem:[%s305 + $0x10] sm:$0xff]
        %v528 = vld [vmem:[%s305 + $0x18] sm:$0xff]
        %v529 = vld [vmem:[%s305 + $0x20] sm:$0xff]
        %v530 = vld [vmem:[%s305 + $0x28] sm:$0xff]
        %v531 = vld [vmem:[%s305 + $0x30] sm:$0xff]
        %v532 = vld [vmem:[%s305 + $0x38] sm:$0xff]
        %v533 = vld [vmem:[%s305 + $0x40] sm:$0xff]
        %v534 = vld [vmem:[%s305 + $0x48] sm:$0xff]
        %v535 = vld [vmem:[%s305 + $0x50] sm:$0xff]
        %v536 = vld [vmem:[%s305 + $0x58] sm:$0xff]
        %v537 = vld [vmem:[%s305 + $0x60] sm:$0xff]
        %v538 = vld [vmem:[%s305 + $0x68] sm:$0xff]
        %v539 = vld [vmem:[%s305 + $0x70] sm:$0xff]
        %v540 = vld [vmem:[%s305 + $0x78] sm:$0xff]
        %v541 = vld [vmem:[%s305 + $0x80] sm:$0xff]
        %v542 = vld [vmem:[%s305 + $0x88] sm:$0xff]
        %v543 = vld [vmem:[%s305 + $0x90] sm:$0xff]
        %v544 = vld [vmem:[%s305 + $0x98] sm:$0xff]
        %v545 = vld [vmem:[%s305 + $0xa0] sm:$0xff]
        %v546 = vld [vmem:[%s305 + $0xa8] sm:$0xff]
        %v547 = vld [vmem:[%s305 + $0xb0] sm:$0xff]
        %v548 = vld [vmem:[%s305 + $0xb8] sm:$0xff]
        %v549 = vld [vmem:[%s305 + $0xc0] sm:$0xff]
        %v550 = vld [vmem:[%s305 + $0xc8] sm:$0xff]
        %v551 = vld [vmem:[%s305 + $0xd0] sm:$0xff]
        %v552 = vld [vmem:[%s305 + $0xd8] sm:$0xff]
        %v553 = vld [vmem:[%s305 + $0xe0] sm:$0xff]
        %v554 = vld [vmem:[%s305 + $0xe8] sm:$0xff]
        %v555 = vld [vmem:[%s305 + $0xf0] sm:$0xff]
        %v556 = vld [vmem:[%s305 + $0xf8] sm:$0xff]
        %v557 = vpack.c.bf16 %v427, %v427
        %558 = vxpose.xlu0.c.b16.start [1/8] %v557, 128
        %559 = vxpose.xlu0.c.b16.cont [2/8] 0, 128
        %560 = vxpose.xlu0.c.b16.cont [3/8] 0, 128
        %561 = vxpose.xlu0.c.b16.cont [4/8] 0, 128
        %562 = vxpose.xlu0.c.b16.cont [5/8] 0, 128
        %563 = vxpose.xlu0.c.b16.cont [6/8] 0, 128
        %564 = vxpose.xlu0.c.b16.cont [7/8] 0, 128
        %565 = vxpose.xlu0.c.b16.end [8/8] 0, 128
        %v566 = vpop.trf.xlu0
        %v567 = vpop.trf.xlu0
        %v568 = vpop.trf.xlu0
        %v569 = vpop.trf.xlu0
        %v570 = vpop.trf.xlu0
        %v571 = vpop.trf.xlu0
        %v572 = vpop.trf.xlu0
        %v573 = vpop.trf.xlu0
        %vm574 = vcmask 64512
        %v576 = vsel %vm574, %v566, 0
        %v579 = vsel %vm574, %v567, 0
        %v582 = vsel %vm574, %v568, 0
        %v585 = vsel %vm574, %v569, 0
        %v588 = vsel %vm574, %v570, 0
        %v591 = vsel %vm574, %v571, 0
        %v594 = vsel %vm574, %v572, 0
        %v597 = vsel %vm574, %v573, 0
        %vm599 = vcmask 1043456
        %v601 = vsel %vm599, %v521, 0
        %v604 = vsel %vm599, %v522, 0
        %606 = vmatprep.subr.bf16.mxu0 0
        %607 = vmatpush1.bf16.msra.mxu0 0
        %608 = vmatprep.subr.bf16.mxu0 0
        %609 = vmatpush1.bf16.msra.mxu0 0
        %610 = vmatprep.subr.bf16.mxu0 0
        %611 = vmatpush1.bf16.msra.mxu0 0
        %612 = vmatprep.subr.bf16.mxu0 0
        %613 = vmatpush1.bf16.msra.mxu0 0
        %614 = vmatprep.subr.bf16.mxu0 0
        %615 = vmatpush1.bf16.msra.mxu0 0
        %616 = vmatprep.subr.bf16.mxu0 0
        %617 = vmatpush1.bf16.msra.mxu0 0
        %618 = vmatprep.subr.bf16.mxu0 0
        %619 = vmatpush1.bf16.msra.mxu0 0
        %620 = vmatprep.subr.bf16.mxu0 %v604
        %621 = vmatpush1.bf16.msra.mxu0 %v601
        %622 = vmatprep.subr.bf16.mxu0 0
        %623 = vmatpush2.bf16.msra.mxu0 0
        %624 = vmatprep.subr.bf16.mxu0 0
        %625 = vmatpush2.bf16.msra.mxu0 0
        %626 = vmatprep.subr.bf16.mxu0 0
        %627 = vmatpush2.bf16.msra.mxu0 0
        %628 = vmatprep.subr.bf16.mxu0 0
        %629 = vmatpush2.bf16.msra.mxu0 0
        %630 = vmatprep.subr.bf16.mxu0 0
        %631 = vmatpush2.bf16.msra.mxu0 0
        %632 = vmatprep.subr.bf16.mxu0 0
        %633 = vmatpush2.bf16.msra.mxu0 0
        %634 = vmatprep.subr.bf16.mxu0 0
        %635 = vmatpush2.bf16.msra.mxu0 0
        %636 = vmatprep.subr.bf16.mxu0 0
        %637 = vmatpush2.bf16.msra.mxu0 0
        %638 = vmatprep.mubr.bf16.mxu0 0
        %639 = vmatmul.mubr.bf16.gmra.mxu0 %v576
        %v640 = vpop.f32.mrf.mxu0
        %v641 = vadd.f32 %v525, %v640
        %v642 = vpop.f32.mrf.mxu0
        %v643 = vadd.f32 %v526, %v642
        %v644 = vpop.f32.mrf.mxu0
        %v645 = vadd.f32 %v527, %v644
        %v646 = vpop.f32.mrf.mxu0
        %v647 = vadd.f32 %v528, %v646
        %648 = vmatprep.mubr.bf16.mxu0 0
        %649 = vmatmul.mubr.bf16.gmra.mxu0 %v579
        %v650 = vpop.f32.mrf.mxu0
        %v651 = vadd.f32 %v529, %v650
        %v652 = vpop.f32.mrf.mxu0
        %v653 = vadd.f32 %v530, %v652
        %v654 = vpop.f32.mrf.mxu0
        %v655 = vadd.f32 %v531, %v654
        %v656 = vpop.f32.mrf.mxu0
        %v657 = vadd.f32 %v532, %v656
        %658 = vmatprep.mubr.bf16.mxu0 0
        %659 = vmatmul.mubr.bf16.gmra.mxu0 %v582
        %v660 = vpop.f32.mrf.mxu0
        %v661 = vadd.f32 %v533, %v660
        %v662 = vpop.f32.mrf.mxu0
        %v663 = vadd.f32 %v534, %v662
        %v664 = vpop.f32.mrf.mxu0
        %v665 = vadd.f32 %v535, %v664
        %v666 = vpop.f32.mrf.mxu0
        %v667 = vadd.f32 %v536, %v666
        %668 = vmatprep.mubr.bf16.mxu0 0
        %669 = vmatmul.mubr.bf16.gmra.mxu0 %v585
        %v670 = vpop.f32.mrf.mxu0
        %v671 = vadd.f32 %v537, %v670
        %v672 = vpop.f32.mrf.mxu0
        %v673 = vadd.f32 %v538, %v672
        %v674 = vpop.f32.mrf.mxu0
        %v675 = vadd.f32 %v539, %v674
        %v676 = vpop.f32.mrf.mxu0
        %v677 = vadd.f32 %v540, %v676
        %678 = vmatprep.mubr.bf16.mxu0 0
        %679 = vmatmul.mubr.bf16.gmra.mxu0 %v588
        %v680 = vpop.f32.mrf.mxu0
        %v681 = vadd.f32 %v541, %v680
        %v682 = vpop.f32.mrf.mxu0
        %v683 = vadd.f32 %v542, %v682
        %v684 = vpop.f32.mrf.mxu0
        %v685 = vadd.f32 %v543, %v684
        %v686 = vpop.f32.mrf.mxu0
        %v687 = vadd.f32 %v544, %v686
        %688 = vmatprep.mubr.bf16.mxu0 0
        %689 = vmatmul.mubr.bf16.gmra.mxu0 %v591
        %v690 = vpop.f32.mrf.mxu0
        %v691 = vadd.f32 %v545, %v690
        %v692 = vpop.f32.mrf.mxu0
        %v693 = vadd.f32 %v546, %v692
        %v694 = vpop.f32.mrf.mxu0
        %v695 = vadd.f32 %v547, %v694
        %v696 = vpop.f32.mrf.mxu0
        %v697 = vadd.f32 %v548, %v696
        %698 = vmatprep.mubr.bf16.mxu0 0
        %699 = vmatmul.mubr.bf16.gmra.mxu0 %v594
        %v700 = vpop.f32.mrf.mxu0
        %v701 = vadd.f32 %v549, %v700
        %v702 = vpop.f32.mrf.mxu0
        %v703 = vadd.f32 %v550, %v702
        %v704 = vpop.f32.mrf.mxu0
        %v705 = vadd.f32 %v551, %v704
        %v706 = vpop.f32.mrf.mxu0
        %v707 = vadd.f32 %v552, %v706
        %708 = vmatprep.mubr.bf16.mxu0 0
        %709 = vmatmul.mubr.bf16.gmra.mxu0 %v597
        %v710 = vpop.f32.mrf.mxu0
        %v711 = vadd.f32 %v553, %v710
        %v712 = vpop.f32.mrf.mxu0
        %v713 = vadd.f32 %v554, %v712
        %v714 = vpop.f32.mrf.mxu0
        %v715 = vadd.f32 %v555, %v714
        %v716 = vpop.f32.mrf.mxu0
        %v717 = vadd.f32 %v556, %v716
        %718 = vdwg.mxu0
        %v719 = vmax.f32 %v641, %v643
        %720 = vmax.xlane.f32.xlu0 %v719
        %v721 = vpop.xlane.xlu0 %720
        %v722 = vmax.f32 %v645, %v647
        %723 = vmax.xlane.f32.xlu0 %v722
        %v724 = vpop.xlane.xlu0 %723
        %v725 = vmax.f32 %v651, %v653
        %726 = vmax.xlane.f32.xlu0 %v725
        %v727 = vpop.xlane.xlu0 %726
        %v728 = vmax.f32 %v655, %v657
        %729 = vmax.xlane.f32.xlu0 %v728
        %v730 = vpop.xlane.xlu0 %729
        %v731 = vmax.f32 %v661, %v663
        %732 = vmax.xlane.f32.xlu0 %v731
        %v733 = vpop.xlane.xlu0 %732
        %v734 = vmax.f32 %v665, %v667
        %735 = vmax.xlane.f32.xlu0 %v734
        %v736 = vpop.xlane.xlu0 %735
        %v737 = vmax.f32 %v671, %v673
        %738 = vmax.xlane.f32.xlu0 %v737
        %v739 = vpop.xlane.xlu0 %738
        %v740 = vmax.f32 %v675, %v677
        %741 = vmax.xlane.f32.xlu0 %v740
        %v742 = vpop.xlane.xlu0 %741
        %v743 = vmax.f32 %v681, %v683
        %744 = vmax.xlane.f32.xlu0 %v743
        %v745 = vpop.xlane.xlu0 %744
        %v746 = vmax.f32 %v685, %v687
        %747 = vmax.xlane.f32.xlu0 %v746
        %v748 = vpop.xlane.xlu0 %747
        %v749 = vmax.f32 %v691, %v693
        %750 = vmax.xlane.f32.xlu0 %v749
        %v751 = vpop.xlane.xlu0 %750
        %v752 = vmax.f32 %v695, %v697
        %753 = vmax.xlane.f32.xlu0 %v752
        %v754 = vpop.xlane.xlu0 %753
        %v755 = vmax.f32 %v701, %v703
        %756 = vmax.xlane.f32.xlu0 %v755
        %v757 = vpop.xlane.xlu0 %756
        %v758 = vmax.f32 %v705, %v707
        %759 = vmax.xlane.f32.xlu0 %v758
        %v760 = vpop.xlane.xlu0 %759
        %v761 = vmax.f32 %v711, %v713
        %762 = vmax.xlane.f32.xlu0 %v761
        %v763 = vpop.xlane.xlu0 %762
        %v764 = vmax.f32 %v715, %v717
        %765 = vmax.xlane.f32.xlu0 %v764
        %v766 = vpop.xlane.xlu0 %765
        %v767 = vsub.f32 %v641, %v721
        %v768 = vsub.f32 %v643, %v721
        %v769 = vsub.f32 %v645, %v724
        %v770 = vsub.f32 %v647, %v724
        %v771 = vsub.f32 %v651, %v727
        %v772 = vsub.f32 %v653, %v727
        %v773 = vsub.f32 %v655, %v730
        %v774 = vsub.f32 %v657, %v730
        %v775 = vsub.f32 %v661, %v733
        %v776 = vsub.f32 %v663, %v733
        %v777 = vsub.f32 %v665, %v736
        %v778 = vsub.f32 %v667, %v736
        %v779 = vsub.f32 %v671, %v739
        %v780 = vsub.f32 %v673, %v739
        %v781 = vsub.f32 %v675, %v742
        %v782 = vsub.f32 %v677, %v742
        %v783 = vsub.f32 %v681, %v745
        %v784 = vsub.f32 %v683, %v745
        %v785 = vsub.f32 %v685, %v748
        %v786 = vsub.f32 %v687, %v748
        %v787 = vsub.f32 %v691, %v751
        %v788 = vsub.f32 %v693, %v751
        %v789 = vsub.f32 %v695, %v754
        %v790 = vsub.f32 %v697, %v754
        %v791 = vsub.f32 %v701, %v757
        %v792 = vsub.f32 %v703, %v757
        %v793 = vsub.f32 %v705, %v760
        %v794 = vsub.f32 %v707, %v760
        %v795 = vsub.f32 %v711, %v763
        %v796 = vsub.f32 %v713, %v763
        %v797 = vsub.f32 %v715, %v766
        %v798 = vsub.f32 %v717, %v766
        %v799 = vmul.f32 %v767, 1.442695
        %v800 = vpow.pop %v799
        %v801 = vmul.f32 %v768, 1.442695
        %v802 = vpow.pop %v801
        %v803 = vmul.f32 %v769, 1.442695
        %v804 = vpow.pop %v803
        %v805 = vmul.f32 %v770, 1.442695
        %v806 = vpow.pop %v805
        %v807 = vmul.f32 %v771, 1.442695
        %v808 = vpow.pop %v807
        %v809 = vmul.f32 %v772, 1.442695
        %v810 = vpow.pop %v809
        %v811 = vmul.f32 %v773, 1.442695
        %v812 = vpow.pop %v811
        %v813 = vmul.f32 %v774, 1.442695
        %v814 = vpow.pop %v813
        %v815 = vmul.f32 %v775, 1.442695
        %v816 = vpow.pop %v815
        %v817 = vmul.f32 %v776, 1.442695
        %v818 = vpow.pop %v817
        %v819 = vmul.f32 %v777, 1.442695
        %v820 = vpow.pop %v819
        %v821 = vmul.f32 %v778, 1.442695
        %v822 = vpow.pop %v821
        %v823 = vmul.f32 %v779, 1.442695
        %v824 = vpow.pop %v823
        %v825 = vmul.f32 %v780, 1.442695
        %v826 = vpow.pop %v825
        %v827 = vmul.f32 %v781, 1.442695
        %v828 = vpow.pop %v827
        %v829 = vmul.f32 %v782, 1.442695
        %v830 = vpow.pop %v829
        %v831 = vmul.f32 %v783, 1.442695
        %v832 = vpow.pop %v831
        %v833 = vmul.f32 %v784, 1.442695
        %v834 = vpow.pop %v833
        %v835 = vmul.f32 %v785, 1.442695
        %v836 = vpow.pop %v835
        %v837 = vmul.f32 %v786, 1.442695
        %v838 = vpow.pop %v837
        %v839 = vmul.f32 %v787, 1.442695
        %v840 = vpow.pop %v839
        %v841 = vmul.f32 %v788, 1.442695
        %v842 = vpow.pop %v841
        %v843 = vmul.f32 %v789, 1.442695
        %v844 = vpow.pop %v843
        %v845 = vmul.f32 %v790, 1.442695
        %v846 = vpow.pop %v845
        %v847 = vmul.f32 %v791, 1.442695
        %v848 = vpow.pop %v847
        %v849 = vmul.f32 %v792, 1.442695
        %v850 = vpow.pop %v849
        %v851 = vmul.f32 %v793, 1.442695
        %v852 = vpow.pop %v851
        %v853 = vmul.f32 %v794, 1.442695
        %v854 = vpow.pop %v853
        %v855 = vmul.f32 %v795, 1.442695
        %v856 = vpow.pop %v855
        %v857 = vmul.f32 %v796, 1.442695
        %v858 = vpow.pop %v857
        %v859 = vmul.f32 %v797, 1.442695
        %v860 = vpow.pop %v859
        %v861 = vmul.f32 %v798, 1.442695
        %v862 = vpow.pop %v861
        %v863 = vadd.f32 %v800, %v802
        %864 = vadd.xlane.f32.xlu0 %v863
        %v865 = vpop.xlane.xlu0 %864
        %v866 = vadd.f32 %v804, %v806
        %867 = vadd.xlane.f32.xlu0 %v866
        %v868 = vpop.xlane.xlu0 %867
        %v869 = vadd.f32 %v808, %v810
        %870 = vadd.xlane.f32.xlu0 %v869
        %v871 = vpop.xlane.xlu0 %870
        %v872 = vadd.f32 %v812, %v814
        %873 = vadd.xlane.f32.xlu0 %v872
        %v874 = vpop.xlane.xlu0 %873
        %v875 = vadd.f32 %v816, %v818
        %876 = vadd.xlane.f32.xlu0 %v875
        %v877 = vpop.xlane.xlu0 %876
        %v878 = vadd.f32 %v820, %v822
        %879 = vadd.xlane.f32.xlu0 %v878
        %v880 = vpop.xlane.xlu0 %879
        %v881 = vadd.f32 %v824, %v826
        %882 = vadd.xlane.f32.xlu0 %v881
        %v883 = vpop.xlane.xlu0 %882
        %v884 = vadd.f32 %v828, %v830
        %885 = vadd.xlane.f32.xlu0 %v884
        %v886 = vpop.xlane.xlu0 %885
        %v887 = vadd.f32 %v832, %v834
        %888 = vadd.xlane.f32.xlu0 %v887
        %v889 = vpop.xlane.xlu0 %888
        %v890 = vadd.f32 %v836, %v838
        %891 = vadd.xlane.f32.xlu0 %v890
        %v892 = vpop.xlane.xlu0 %891
        %v893 = vadd.f32 %v840, %v842
        %894 = vadd.xlane.f32.xlu0 %v893
        %v895 = vpop.xlane.xlu0 %894
        %v896 = vadd.f32 %v844, %v846
        %897 = vadd.xlane.f32.xlu0 %v896
        %v898 = vpop.xlane.xlu0 %897
        %v899 = vadd.f32 %v848, %v850
        %900 = vadd.xlane.f32.xlu0 %v899
        %v901 = vpop.xlane.xlu0 %900
        %v902 = vadd.f32 %v852, %v854
        %903 = vadd.xlane.f32.xlu0 %v902
        %v904 = vpop.xlane.xlu0 %903
        %v905 = vadd.f32 %v856, %v858
        %906 = vadd.xlane.f32.xlu0 %v905
        %v907 = vpop.xlane.xlu0 %906
        %v908 = vadd.f32 %v860, %v862
        %909 = vadd.xlane.f32.xlu0 %v908
        %v910 = vpop.xlane.xlu0 %909
        %v911 = vpack.c.bf16 %v804, %v800
        %v912 = vpack.c.bf16 %v806, %v802
        %v913 = vpack.c.bf16 %v812, %v808
        %v914 = vpack.c.bf16 %v814, %v810
        %v915 = vpack.c.bf16 %v820, %v816
        %v916 = vpack.c.bf16 %v822, %v818
        %v917 = vpack.c.bf16 %v828, %v824
        %v918 = vpack.c.bf16 %v830, %v826
        %v919 = vpack.c.bf16 %v836, %v832
        %v920 = vpack.c.bf16 %v838, %v834
        %v921 = vpack.c.bf16 %v844, %v840
        %v922 = vpack.c.bf16 %v846, %v842
        %v923 = vpack.c.bf16 %v852, %v848
        %v924 = vpack.c.bf16 %v854, %v850
        %v925 = vpack.c.bf16 %v860, %v856
        %v926 = vpack.c.bf16 %v862, %v858
        %927 = vmatprep.subr.bf16.mxu0 %v926
        %928 = vmatpush1.bf16.xpose.msra.mxu0 %v925
        %929 = vmatprep.subr.bf16.mxu0 %v924
        %930 = vmatpush1.bf16.xpose.msra.mxu0 %v923
        %931 = vmatprep.subr.bf16.mxu0 %v922
        %932 = vmatpush1.bf16.xpose.msra.mxu0 %v921
        %933 = vmatprep.subr.bf16.mxu0 %v920
        %934 = vmatpush1.bf16.xpose.msra.mxu0 %v919
        %935 = vmatprep.subr.bf16.mxu0 %v918
        %936 = vmatpush1.bf16.xpose.msra.mxu0 %v917
        %937 = vmatprep.subr.bf16.mxu0 %v916
        %938 = vmatpush1.bf16.xpose.msra.mxu0 %v915
        %939 = vmatprep.subr.bf16.mxu0 %v914
        %940 = vmatpush1.bf16.xpose.msra.mxu0 %v913
        %941 = vmatprep.subr.bf16.mxu0 %v912
        %942 = vmatpush1.bf16.xpose.msra.mxu0 %v911
        %943 = vmatprep.subr.bf16.mxu0 0
        %944 = vmatpush2.bf16.xpose.msra.mxu0 0
        %945 = vmatprep.subr.bf16.mxu0 0
        %946 = vmatpush2.bf16.xpose.msra.mxu0 0
        %947 = vmatprep.subr.bf16.mxu0 0
        %948 = vmatpush2.bf16.xpose.msra.mxu0 0
        %949 = vmatprep.subr.bf16.mxu0 0
        %950 = vmatpush2.bf16.xpose.msra.mxu0 0
        %951 = vmatprep.subr.bf16.mxu0 0
        %952 = vmatpush2.bf16.xpose.msra.mxu0 0
        %953 = vmatprep.subr.bf16.mxu0 0
        %954 = vmatpush2.bf16.xpose.msra.mxu0 0
        %955 = vmatprep.subr.bf16.mxu0 0
        %956 = vmatpush2.bf16.xpose.msra.mxu0 0
        %957 = vmatprep.subr.bf16.mxu0 0
        %958 = vmatpush2.bf16.xpose.msra.mxu0 0
        %959 = vmatprep.mubr.bf16.mxu0 %v524
        %960 = vmatmul.mubr.bf16.gmra.mxu0 %v523
        %v961 = vpop.f32.mrf.mxu0
        %v962 = vadd.f32 0.0, %v961
        %v963 = vpop.f32.mrf.mxu0
        %v964 = vpop.f32.mrf.mxu0
        %v965 = vpop.f32.mrf.mxu0
        %966 = vdwg.mxu0
        %v967 = vrcp.pop %v865
        %v968 = vrcp.pop %v868
        %v969 = vrcp.pop %v871
        %v970 = vrcp.pop %v874
        %v971 = vrcp.pop %v877
        %v972 = vrcp.pop %v880
        %v973 = vrcp.pop %v883
        %v974 = vrcp.pop %v886
        %v975 = vrcp.pop %v889
        %v976 = vrcp.pop %v892
        %v977 = vrcp.pop %v895
        %v978 = vrcp.pop %v898
        %v979 = vrcp.pop %v901
        %v980 = vrcp.pop %v904
        %v981 = vrcp.pop %v907
        %v982 = vrcp.pop %v910
        %983 = vxpose.xlu0.b32.start [1/16] %v967, 128
        %984 = vxpose.xlu0.b32.cont [2/16] %v968, 128
        %985 = vxpose.xlu0.b32.cont [3/16] %v969, 128
        %986 = vxpose.xlu0.b32.cont [4/16] %v970, 128
        %987 = vxpose.xlu0.b32.cont [5/16] %v971, 128
        %988 = vxpose.xlu0.b32.cont [6/16] %v972, 128
        %989 = vxpose.xlu0.b32.cont [7/16] %v973, 128
        %990 = vxpose.xlu0.b32.cont [8/16] %v974, 128
        %991 = vxpose.xlu0.b32.cont [9/16] %v975, 128
        %992 = vxpose.xlu0.b32.cont [10/16] %v976, 128
        %993 = vxpose.xlu0.b32.cont [11/16] %v977, 128
        %994 = vxpose.xlu0.b32.cont [12/16] %v978, 128
        %995 = vxpose.xlu0.b32.cont [13/16] %v979, 128
        %996 = vxpose.xlu0.b32.cont [14/16] %v980, 128
        %997 = vxpose.xlu0.b32.cont [15/16] %v981, 128
        %998 = vxpose.xlu0.b32.end [16/16] %v982, 128
        %v999 = vpop.trf.xlu0
        %v1000 = vpop.trf.xlu0
        %v1001 = vpop.trf.xlu0
        %v1002 = vpop.trf.xlu0
        %v1003 = vpop.trf.xlu0
        %v1004 = vpop.trf.xlu0
        %v1005 = vpop.trf.xlu0
        %v1006 = vpop.trf.xlu0
        %v1007 = vpop.trf.xlu0
        %v1008 = vpop.trf.xlu0
        %v1009 = vpop.trf.xlu0
        %v1010 = vpop.trf.xlu0
        %v1011 = vpop.trf.xlu0
        %v1012 = vpop.trf.xlu0
        %v1013 = vpop.trf.xlu0
        %v1014 = vpop.trf.xlu0
        %v1015 = vlaneseq
        %v1016 = vshrl.u32 %v1015, 7
        %v1017 = vsub.s32 0, %v1016
        %v1018 = vrot.slane %v999, %v1017
        %v1019 = vmul.f32 %v962, %v1018
        %v1020 = vld [vmem:[%s4] sm:$0xf]
        %v1021 = vpack.c.bf16 %v1019, %v1019
        %v1022 = vpack.c.bf16 %v430, %v430
        %1023 = vxpose.xlu0.c.b16.start [1/8] %v1022, 128
        %1024 = vxpose.xlu0.c.b16.cont [2/8] 0, 128
        %1025 = vxpose.xlu0.c.b16.cont [3/8] 0, 128
        %1026 = vxpose.xlu0.c.b16.cont [4/8] 0, 128
        %1027 = vxpose.xlu0.c.b16.cont [5/8] 0, 128
        %1028 = vxpose.xlu0.c.b16.cont [6/8] 0, 128
        %1029 = vxpose.xlu0.c.b16.cont [7/8] 0, 128
        %1030 = vxpose.xlu0.c.b16.end [8/8] 0, 128
        %v1031 = vpop.trf.xlu0
        %v1032 = vpop.trf.xlu0
        %v1033 = vpop.trf.xlu0
        %v1034 = vpop.trf.xlu0
        %v1035 = vpop.trf.xlu0
        %v1036 = vpop.trf.xlu0
        %v1037 = vpop.trf.xlu0
        %v1038 = vpop.trf.xlu0
        %v1041 = vrot.slane %v521, 4
        %v1042 = vrot.slane %v522, 4
        %v1044 = vsel %vm574, %v1031, 0
        %v1047 = vsel %vm574, %v1032, 0
        %v1050 = vsel %vm574, %v1033, 0
        %v1053 = vsel %vm574, %v1034, 0
        %v1056 = vsel %vm574, %v1035, 0
        %v1059 = vsel %vm574, %v1036, 0
        %v1062 = vsel %vm574, %v1037, 0
        %v1065 = vsel %vm574, %v1038, 0
        %v1068 = vsel %vm599, %v1041, 0
        %v1071 = vsel %vm599, %v1042, 0
        %1073 = vmatprep.subr.bf16.mxu0 0
        %1074 = vmatpush1.bf16.msra.mxu0 0
        %1075 = vmatprep.subr.bf16.mxu0 0
        %1076 = vmatpush1.bf16.msra.mxu0 0
        %1077 = vmatprep.subr.bf16.mxu0 0
        %1078 = vmatpush1.bf16.msra.mxu0 0
        %1079 = vmatprep.subr.bf16.mxu0 0
        %1080 = vmatpush1.bf16.msra.mxu0 0
        %1081 = vmatprep.subr.bf16.mxu0 0
        %1082 = vmatpush1.bf16.msra.mxu0 0
        %1083 = vmatprep.subr.bf16.mxu0 0
        %1084 = vmatpush1.bf16.msra.mxu0 0
        %1085 = vmatprep.subr.bf16.mxu0 0
        %1086 = vmatpush1.bf16.msra.mxu0 0
        %1087 = vmatprep.subr.bf16.mxu0 %v1071
        %1088 = vmatpush1.bf16.msra.mxu0 %v1068
        %1089 = vmatprep.subr.bf16.mxu0 0
        %1090 = vmatpush2.bf16.msra.mxu0 0
        %1091 = vmatprep.subr.bf16.mxu0 0
        %1092 = vmatpush2.bf16.msra.mxu0 0
        %1093 = vmatprep.subr.bf16.mxu0 0
        %1094 = vmatpush2.bf16.msra.mxu0 0
        %1095 = vmatprep.subr.bf16.mxu0 0
        %1096 = vmatpush2.bf16.msra.mxu0 0
        %1097 = vmatprep.subr.bf16.mxu0 0
        %1098 = vmatpush2.bf16.msra.mxu0 0
        %1099 = vmatprep.subr.bf16.mxu0 0
        %1100 = vmatpush2.bf16.msra.mxu0 0
        %1101 = vmatprep.subr.bf16.mxu0 0
        %1102 = vmatpush2.bf16.msra.mxu0 0
        %1103 = vmatprep.subr.bf16.mxu0 0
        %1104 = vmatpush2.bf16.msra.mxu0 0
        %1105 = vmatprep.mubr.bf16.mxu0 0
        %1106 = vmatmul.mubr.bf16.gmra.mxu0 %v1044
        %v1107 = vpop.f32.mrf.mxu0
        %v1108 = vadd.f32 %v525, %v1107
        %v1109 = vpop.f32.mrf.mxu0
        %v1110 = vadd.f32 %v526, %v1109
        %v1111 = vpop.f32.mrf.mxu0
        %v1112 = vadd.f32 %v527, %v1111
        %v1113 = vpop.f32.mrf.mxu0
        %v1114 = vadd.f32 %v528, %v1113
        %1115 = vmatprep.mubr.bf16.mxu0 0
        %1116 = vmatmul.mubr.bf16.gmra.mxu0 %v1047
        %v1117 = vpop.f32.mrf.mxu0
        %v1118 = vadd.f32 %v529, %v1117
        %v1119 = vpop.f32.mrf.mxu0
        %v1120 = vadd.f32 %v530, %v1119
        %v1121 = vpop.f32.mrf.mxu0
        %v1122 = vadd.f32 %v531, %v1121
        %v1123 = vpop.f32.mrf.mxu0
        %v1124 = vadd.f32 %v532, %v1123
        %1125 = vmatprep.mubr.bf16.mxu0 0
        %1126 = vmatmul.mubr.bf16.gmra.mxu0 %v1050
        %v1127 = vpop.f32.mrf.mxu0
        %v1128 = vadd.f32 %v533, %v1127
        %v1129 = vpop.f32.mrf.mxu0
        %v1130 = vadd.f32 %v534, %v1129
        %v1131 = vpop.f32.mrf.mxu0
        %v1132 = vadd.f32 %v535, %v1131
        %v1133 = vpop.f32.mrf.mxu0
        %v1134 = vadd.f32 %v536, %v1133
        %1135 = vmatprep.mubr.bf16.mxu0 0
        %1136 = vmatmul.mubr.bf16.gmra.mxu0 %v1053
        %v1137 = vpop.f32.mrf.mxu0
        %v1138 = vadd.f32 %v537, %v1137
        %v1139 = vpop.f32.mrf.mxu0
        %v1140 = vadd.f32 %v538, %v1139
        %v1141 = vpop.f32.mrf.mxu0
        %v1142 = vadd.f32 %v539, %v1141
        %v1143 = vpop.f32.mrf.mxu0
        %v1144 = vadd.f32 %v540, %v1143
        %1145 = vmatprep.mubr.bf16.mxu0 0
        %1146 = vmatmul.mubr.bf16.gmra.mxu0 %v1056
        %v1147 = vpop.f32.mrf.mxu0
        %v1148 = vadd.f32 %v541, %v1147
        %v1149 = vpop.f32.mrf.mxu0
        %v1150 = vadd.f32 %v542, %v1149
        %v1151 = vpop.f32.mrf.mxu0
        %v1152 = vadd.f32 %v543, %v1151
        %v1153 = vpop.f32.mrf.mxu0
        %v1154 = vadd.f32 %v544, %v1153
        %1155 = vmatprep.mubr.bf16.mxu0 0
        %1156 = vmatmul.mubr.bf16.gmra.mxu0 %v1059
        %v1157 = vpop.f32.mrf.mxu0
        %v1158 = vadd.f32 %v545, %v1157
        %v1159 = vpop.f32.mrf.mxu0
        %v1160 = vadd.f32 %v546, %v1159
        %v1161 = vpop.f32.mrf.mxu0
        %v1162 = vadd.f32 %v547, %v1161
        %v1163 = vpop.f32.mrf.mxu0
        %v1164 = vadd.f32 %v548, %v1163
        %1165 = vmatprep.mubr.bf16.mxu0 0
        %1166 = vmatmul.mubr.bf16.gmra.mxu0 %v1062
        %v1167 = vpop.f32.mrf.mxu0
        %v1168 = vadd.f32 %v549, %v1167
        %v1169 = vpop.f32.mrf.mxu0
        %v1170 = vadd.f32 %v550, %v1169
        %v1171 = vpop.f32.mrf.mxu0
        %v1172 = vadd.f32 %v551, %v1171
        %v1173 = vpop.f32.mrf.mxu0
        %v1174 = vadd.f32 %v552, %v1173
        %1175 = vmatprep.mubr.bf16.mxu0 0
        %1176 = vmatmul.mubr.bf16.gmra.mxu0 %v1065
        %v1177 = vpop.f32.mrf.mxu0
        %v1178 = vadd.f32 %v553, %v1177
        %v1179 = vpop.f32.mrf.mxu0
        %v1180 = vadd.f32 %v554, %v1179
        %v1181 = vpop.f32.mrf.mxu0
        %v1182 = vadd.f32 %v555, %v1181
        %v1183 = vpop.f32.mrf.mxu0
        %v1184 = vadd.f32 %v556, %v1183
        %1185 = vdwg.mxu0
        %v1186 = vmax.f32 %v1108, %v1110
        %1187 = vmax.xlane.f32.xlu0 %v1186
        %v1188 = vpop.xlane.xlu0 %1187
        %v1189 = vmax.f32 %v1112, %v1114
        %1190 = vmax.xlane.f32.xlu0 %v1189
        %v1191 = vpop.xlane.xlu0 %1190
        %v1192 = vmax.f32 %v1118, %v1120
        %1193 = vmax.xlane.f32.xlu0 %v1192
        %v1194 = vpop.xlane.xlu0 %1193
        %v1195 = vmax.f32 %v1122, %v1124
        %1196 = vmax.xlane.f32.xlu0 %v1195
        %v1197 = vpop.xlane.xlu0 %1196
        %v1198 = vmax.f32 %v1128, %v1130
        %1199 = vmax.xlane.f32.xlu0 %v1198
        %v1200 = vpop.xlane.xlu0 %1199
        %v1201 = vmax.f32 %v1132, %v1134
        %1202 = vmax.xlane.f32.xlu0 %v1201
        %v1203 = vpop.xlane.xlu0 %1202
        %v1204 = vmax.f32 %v1138, %v1140
        %1205 = vmax.xlane.f32.xlu0 %v1204
        %v1206 = vpop.xlane.xlu0 %1205
        %v1207 = vmax.f32 %v1142, %v1144
        %1208 = vmax.xlane.f32.xlu0 %v1207
        %v1209 = vpop.xlane.xlu0 %1208
        %v1210 = vmax.f32 %v1148, %v1150
        %1211 = vmax.xlane.f32.xlu0 %v1210
        %v1212 = vpop.xlane.xlu0 %1211
        %v1213 = vmax.f32 %v1152, %v1154
        %1214 = vmax.xlane.f32.xlu0 %v1213
        %v1215 = vpop.xlane.xlu0 %1214
        %v1216 = vmax.f32 %v1158, %v1160
        %1217 = vmax.xlane.f32.xlu0 %v1216
        %v1218 = vpop.xlane.xlu0 %1217
        %v1219 = vmax.f32 %v1162, %v1164
        %1220 = vmax.xlane.f32.xlu0 %v1219
        %v1221 = vpop.xlane.xlu0 %1220
        %v1222 = vmax.f32 %v1168, %v1170
        %1223 = vmax.xlane.f32.xlu0 %v1222
        %v1224 = vpop.xlane.xlu0 %1223
        %v1225 = vmax.f32 %v1172, %v1174
        %1226 = vmax.xlane.f32.xlu0 %v1225
        %v1227 = vpop.xlane.xlu0 %1226
        %v1228 = vmax.f32 %v1178, %v1180
        %1229 = vmax.xlane.f32.xlu0 %v1228
        %v1230 = vpop.xlane.xlu0 %1229
        %v1231 = vmax.f32 %v1182, %v1184
        %1232 = vmax.xlane.f32.xlu0 %v1231
        %v1233 = vpop.xlane.xlu0 %1232
        %v1234 = vsub.f32 %v1108, %v1188
        %v1235 = vsub.f32 %v1110, %v1188
        %v1236 = vsub.f32 %v1112, %v1191
        %v1237 = vsub.f32 %v1114, %v1191
        %v1238 = vsub.f32 %v1118, %v1194
        %v1239 = vsub.f32 %v1120, %v1194
        %v1240 = vsub.f32 %v1122, %v1197
        %v1241 = vsub.f32 %v1124, %v1197
        %v1242 = vsub.f32 %v1128, %v1200
        %v1243 = vsub.f32 %v1130, %v1200
        %v1244 = vsub.f32 %v1132, %v1203
        %v1245 = vsub.f32 %v1134, %v1203
        %v1246 = vsub.f32 %v1138, %v1206
        %v1247 = vsub.f32 %v1140, %v1206
        %v1248 = vsub.f32 %v1142, %v1209
        %v1249 = vsub.f32 %v1144, %v1209
        %v1250 = vsub.f32 %v1148, %v1212
        %v1251 = vsub.f32 %v1150, %v1212
        %v1252 = vsub.f32 %v1152, %v1215
        %v1253 = vsub.f32 %v1154, %v1215
        %v1254 = vsub.f32 %v1158, %v1218
        %v1255 = vsub.f32 %v1160, %v1218
        %v1256 = vsub.f32 %v1162, %v1221
        %v1257 = vsub.f32 %v1164, %v1221
        %v1258 = vsub.f32 %v1168, %v1224
        %v1259 = vsub.f32 %v1170, %v1224
        %v1260 = vsub.f32 %v1172, %v1227
        %v1261 = vsub.f32 %v1174, %v1227
        %v1262 = vsub.f32 %v1178, %v1230
        %v1263 = vsub.f32 %v1180, %v1230
        %v1264 = vsub.f32 %v1182, %v1233
        %v1265 = vsub.f32 %v1184, %v1233
        %v1266 = vmul.f32 %v1234, 1.442695
        %v1267 = vpow.pop %v1266
        %v1268 = vmul.f32 %v1235, 1.442695
        %v1269 = vpow.pop %v1268
        %v1270 = vmul.f32 %v1236, 1.442695
        %v1271 = vpow.pop %v1270
        %v1272 = vmul.f32 %v1237, 1.442695
        %v1273 = vpow.pop %v1272
        %v1274 = vmul.f32 %v1238, 1.442695
        %v1275 = vpow.pop %v1274
        %v1276 = vmul.f32 %v1239, 1.442695
        %v1277 = vpow.pop %v1276
        %v1278 = vmul.f32 %v1240, 1.442695
        %v1279 = vpow.pop %v1278
        %v1280 = vmul.f32 %v1241, 1.442695
        %v1281 = vpow.pop %v1280
        %v1282 = vmul.f32 %v1242, 1.442695
        %v1283 = vpow.pop %v1282
        %v1284 = vmul.f32 %v1243, 1.442695
        %v1285 = vpow.pop %v1284
        %v1286 = vmul.f32 %v1244, 1.442695
        %v1287 = vpow.pop %v1286
        %v1288 = vmul.f32 %v1245, 1.442695
        %v1289 = vpow.pop %v1288
        %v1290 = vmul.f32 %v1246, 1.442695
        %v1291 = vpow.pop %v1290
        %v1292 = vmul.f32 %v1247, 1.442695
        %v1293 = vpow.pop %v1292
        %v1294 = vmul.f32 %v1248, 1.442695
        %v1295 = vpow.pop %v1294
        %v1296 = vmul.f32 %v1249, 1.442695
        %v1297 = vpow.pop %v1296
        %v1298 = vmul.f32 %v1250, 1.442695
        %v1299 = vpow.pop %v1298
        %v1300 = vmul.f32 %v1251, 1.442695
        %v1301 = vpow.pop %v1300
        %v1302 = vmul.f32 %v1252, 1.442695
        %v1303 = vpow.pop %v1302
        %v1304 = vmul.f32 %v1253, 1.442695
        %v1305 = vpow.pop %v1304
        %v1306 = vmul.f32 %v1254, 1.442695
        %v1307 = vpow.pop %v1306
        %v1308 = vmul.f32 %v1255, 1.442695
        %v1309 = vpow.pop %v1308
        %v1310 = vmul.f32 %v1256, 1.442695
        %v1311 = vpow.pop %v1310
        %v1312 = vmul.f32 %v1257, 1.442695
        %v1313 = vpow.pop %v1312
        %v1314 = vmul.f32 %v1258, 1.442695
        %v1315 = vpow.pop %v1314
        %v1316 = vmul.f32 %v1259, 1.442695
        %v1317 = vpow.pop %v1316
        %v1318 = vmul.f32 %v1260, 1.442695
        %v1319 = vpow.pop %v1318
        %v1320 = vmul.f32 %v1261, 1.442695
        %v1321 = vpow.pop %v1320
        %v1322 = vmul.f32 %v1262, 1.442695
        %v1323 = vpow.pop %v1322
        %v1324 = vmul.f32 %v1263, 1.442695
        %v1325 = vpow.pop %v1324
        %v1326 = vmul.f32 %v1264, 1.442695
        %v1327 = vpow.pop %v1326
        %v1328 = vmul.f32 %v1265, 1.442695
        %v1329 = vpow.pop %v1328
        %v1330 = vadd.f32 %v1267, %v1269
        %1331 = vadd.xlane.f32.xlu0 %v1330
        %v1332 = vpop.xlane.xlu0 %1331
        %v1333 = vadd.f32 %v1271, %v1273
        %1334 = vadd.xlane.f32.xlu0 %v1333
        %v1335 = vpop.xlane.xlu0 %1334
        %v1336 = vadd.f32 %v1275, %v1277
        %1337 = vadd.xlane.f32.xlu0 %v1336
        %v1338 = vpop.xlane.xlu0 %1337
        %v1339 = vadd.f32 %v1279, %v1281
        %1340 = vadd.xlane.f32.xlu0 %v1339
        %v1341 = vpop.xlane.xlu0 %1340
        %v1342 = vadd.f32 %v1283, %v1285
        %1343 = vadd.xlane.f32.xlu0 %v1342
        %v1344 = vpop.xlane.xlu0 %1343
        %v1345 = vadd.f32 %v1287, %v1289
        %1346 = vadd.xlane.f32.xlu0 %v1345
        %v1347 = vpop.xlane.xlu0 %1346
        %v1348 = vadd.f32 %v1291, %v1293
        %1349 = vadd.xlane.f32.xlu0 %v1348
        %v1350 = vpop.xlane.xlu0 %1349
        %v1351 = vadd.f32 %v1295, %v1297
        %1352 = vadd.xlane.f32.xlu0 %v1351
        %v1353 = vpop.xlane.xlu0 %1352
        %v1354 = vadd.f32 %v1299, %v1301
        %1355 = vadd.xlane.f32.xlu0 %v1354
        %v1356 = vpop.xlane.xlu0 %1355
        %v1357 = vadd.f32 %v1303, %v1305
        %1358 = vadd.xlane.f32.xlu0 %v1357
        %v1359 = vpop.xlane.xlu0 %1358
        %v1360 = vadd.f32 %v1307, %v1309
        %1361 = vadd.xlane.f32.xlu0 %v1360
        %v1362 = vpop.xlane.xlu0 %1361
        %v1363 = vadd.f32 %v1311, %v1313
        %1364 = vadd.xlane.f32.xlu0 %v1363
        %v1365 = vpop.xlane.xlu0 %1364
        %v1366 = vadd.f32 %v1315, %v1317
        %1367 = vadd.xlane.f32.xlu0 %v1366
        %v1368 = vpop.xlane.xlu0 %1367
        %v1369 = vadd.f32 %v1319, %v1321
        %1370 = vadd.xlane.f32.xlu0 %v1369
        %v1371 = vpop.xlane.xlu0 %1370
        %v1372 = vadd.f32 %v1323, %v1325
        %1373 = vadd.xlane.f32.xlu0 %v1372
        %v1374 = vpop.xlane.xlu0 %1373
        %v1375 = vadd.f32 %v1327, %v1329
        %1376 = vadd.xlane.f32.xlu0 %v1375
        %v1377 = vpop.xlane.xlu0 %1376
        %v1378 = vpack.c.bf16 %v1271, %v1267
        %v1379 = vpack.c.bf16 %v1273, %v1269
        %v1380 = vpack.c.bf16 %v1279, %v1275
        %v1381 = vpack.c.bf16 %v1281, %v1277
        %v1382 = vpack.c.bf16 %v1287, %v1283
        %v1383 = vpack.c.bf16 %v1289, %v1285
        %v1384 = vpack.c.bf16 %v1295, %v1291
        %v1385 = vpack.c.bf16 %v1297, %v1293
        %v1386 = vpack.c.bf16 %v1303, %v1299
        %v1387 = vpack.c.bf16 %v1305, %v1301
        %v1388 = vpack.c.bf16 %v1311, %v1307
        %v1389 = vpack.c.bf16 %v1313, %v1309
        %v1390 = vpack.c.bf16 %v1319, %v1315
        %v1391 = vpack.c.bf16 %v1321, %v1317
        %v1392 = vpack.c.bf16 %v1327, %v1323
        %v1393 = vpack.c.bf16 %v1329, %v1325
        %v1396 = vrot.slane %v523, 4
        %v1397 = vrot.slane %v524, 4
        %1400 = vmatprep.subr.bf16.mxu0 %v1393
        %1401 = vmatpush1.bf16.xpose.msra.mxu0 %v1392
        %1402 = vmatprep.subr.bf16.mxu0 %v1391
        %1403 = vmatpush1.bf16.xpose.msra.mxu0 %v1390
        %1404 = vmatprep.subr.bf16.mxu0 %v1389
        %1405 = vmatpush1.bf16.xpose.msra.mxu0 %v1388
        %1406 = vmatprep.subr.bf16.mxu0 %v1387
        %1407 = vmatpush1.bf16.xpose.msra.mxu0 %v1386
        %1408 = vmatprep.subr.bf16.mxu0 %v1385
        %1409 = vmatpush1.bf16.xpose.msra.mxu0 %v1384
        %1410 = vmatprep.subr.bf16.mxu0 %v1383
        %1411 = vmatpush1.bf16.xpose.msra.mxu0 %v1382
        %1412 = vmatprep.subr.bf16.mxu0 %v1381
        %1413 = vmatpush1.bf16.xpose.msra.mxu0 %v1380
        %1414 = vmatprep.subr.bf16.mxu0 %v1379
        %1415 = vmatpush1.bf16.xpose.msra.mxu0 %v1378
        %1416 = vmatprep.subr.bf16.mxu0 0
        %1417 = vmatpush2.bf16.xpose.msra.mxu0 0
        %1418 = vmatprep.subr.bf16.mxu0 0
        %1419 = vmatpush2.bf16.xpose.msra.mxu0 0
        %1420 = vmatprep.subr.bf16.mxu0 0
        %1421 = vmatpush2.bf16.xpose.msra.mxu0 0
        %1422 = vmatprep.subr.bf16.mxu0 0
        %1423 = vmatpush2.bf16.xpose.msra.mxu0 0
        %1424 = vmatprep.subr.bf16.mxu0 0
        %1425 = vmatpush2.bf16.xpose.msra.mxu0 0
        %1426 = vmatprep.subr.bf16.mxu0 0
        %1427 = vmatpush2.bf16.xpose.msra.mxu0 0
        %1428 = vmatprep.subr.bf16.mxu0 0
        %1429 = vmatpush2.bf16.xpose.msra.mxu0 0
        %1430 = vmatprep.subr.bf16.mxu0 0
        %1431 = vmatpush2.bf16.xpose.msra.mxu0 0
        %1432 = vmatprep.mubr.bf16.mxu0 %v1397
        %1433 = vmatmul.mubr.bf16.gmra.mxu0 %v1396
        %v1434 = vpop.f32.mrf.mxu0
        %v1435 = vadd.f32 0.0, %v1434
        %v1436 = vpop.f32.mrf.mxu0
        %v1437 = vpop.f32.mrf.mxu0
        %v1438 = vpop.f32.mrf.mxu0
        %1439 = vdwg.mxu0
        %v1440 = vrcp.pop %v1332
        %v1441 = vrcp.pop %v1335
        %v1442 = vrcp.pop %v1338
        %v1443 = vrcp.pop %v1341
        %v1444 = vrcp.pop %v1344
        %v1445 = vrcp.pop %v1347
        %v1446 = vrcp.pop %v1350
        %v1447 = vrcp.pop %v1353
        %v1448 = vrcp.pop %v1356
        %v1449 = vrcp.pop %v1359
        %v1450 = vrcp.pop %v1362
        %v1451 = vrcp.pop %v1365
        %v1452 = vrcp.pop %v1368
        %v1453 = vrcp.pop %v1371
        %v1454 = vrcp.pop %v1374
        %v1455 = vrcp.pop %v1377
        %1456 = vxpose.xlu0.b32.start [1/16] %v1440, 128
        %1457 = vxpose.xlu0.b32.cont [2/16] %v1441, 128
        %1458 = vxpose.xlu0.b32.cont [3/16] %v1442, 128
        %1459 = vxpose.xlu0.b32.cont [4/16] %v1443, 128
        %1460 = vxpose.xlu0.b32.cont [5/16] %v1444, 128
        %1461 = vxpose.xlu0.b32.cont [6/16] %v1445, 128
        %1462 = vxpose.xlu0.b32.cont [7/16] %v1446, 128
        %1463 = vxpose.xlu0.b32.cont [8/16] %v1447, 128
        %1464 = vxpose.xlu0.b32.cont [9/16] %v1448, 128
        %1465 = vxpose.xlu0.b32.cont [10/16] %v1449, 128
        %1466 = vxpose.xlu0.b32.cont [11/16] %v1450, 128
        %1467 = vxpose.xlu0.b32.cont [12/16] %v1451, 128
        %1468 = vxpose.xlu0.b32.cont [13/16] %v1452, 128
        %1469 = vxpose.xlu0.b32.cont [14/16] %v1453, 128
        %1470 = vxpose.xlu0.b32.cont [15/16] %v1454, 128
        %1471 = vxpose.xlu0.b32.end [16/16] %v1455, 128
        %v1472 = vpop.trf.xlu0
        %v1473 = vpop.trf.xlu0
        %v1474 = vpop.trf.xlu0
        %v1475 = vpop.trf.xlu0
        %v1476 = vpop.trf.xlu0
        %v1477 = vpop.trf.xlu0
        %v1478 = vpop.trf.xlu0
        %v1479 = vpop.trf.xlu0
        %v1480 = vpop.trf.xlu0
        %v1481 = vpop.trf.xlu0
        %v1482 = vpop.trf.xlu0
        %v1483 = vpop.trf.xlu0
        %v1484 = vpop.trf.xlu0
        %v1485 = vpop.trf.xlu0
        %v1486 = vpop.trf.xlu0
        %v1487 = vpop.trf.xlu0
        %v1488 = vlaneseq
        %v1489 = vshrl.u32 %v1488, 7
        %v1490 = vsub.s32 0, %v1489
        %v1491 = vrot.slane %v1472, %v1490
        %v1492 = vmul.f32 %v1435, %v1491
        %v1493 = vld [vmem:[%s4 + $0x4] sm:$0xf]
        %v1494 = vpack.c.bf16 %v1492, %v1492
        %1495 = vxpose.xlu0.c.b16.start [1/8] %v1493, 128
        %1496 = vxpose.xlu0.c.b16.cont [2/8] 0, 128
        %1497 = vxpose.xlu0.c.b16.cont [3/8] 0, 128
        %1498 = vxpose.xlu0.c.b16.cont [4/8] 0, 128
        %1499 = vxpose.xlu0.c.b16.cont [5/8] 0, 128
        %1500 = vxpose.xlu0.c.b16.cont [6/8] 0, 128
        %1501 = vxpose.xlu0.c.b16.cont [7/8] 0, 128
        %1502 = vxpose.xlu0.c.b16.end [8/8] 0, 128
        %v1503 = vpop.trf.xlu0
        %v1504 = vpop.trf.xlu0
        %v1505 = vpop.trf.xlu0
        %v1506 = vpop.trf.xlu0
        %v1507 = vpop.trf.xlu0
        %v1508 = vpop.trf.xlu0
        %v1509 = vpop.trf.xlu0
        %v1510 = vpop.trf.xlu0
        %v1512 = vsel %vm574, %v1503, 0
        %v1515 = vsel %vm599, %v1494, 0
        %1517 = vmatprep.subr.bf16.mxu0 0
        %1518 = vmatpush1.bf16.msra.mxu0 0
        %1519 = vmatprep.subr.bf16.mxu0 0
        %1520 = vmatpush1.bf16.msra.mxu0 0
        %1521 = vmatprep.subr.bf16.mxu0 0
        %1522 = vmatpush1.bf16.msra.mxu0 0
        %1523 = vmatprep.subr.bf16.mxu0 0
        %1524 = vmatpush1.bf16.msra.mxu0 0
        %1525 = vmatprep.subr.bf16.mxu0 0
        %1526 = vmatpush1.bf16.msra.mxu0 0
        %1527 = vmatprep.subr.bf16.mxu0 0
        %1528 = vmatpush1.bf16.msra.mxu0 0
        %1529 = vmatprep.subr.bf16.mxu0 0
        %1530 = vmatpush1.bf16.msra.mxu0 0
        %1531 = vmatprep.subr.bf16.mxu0 0
        %1532 = vmatpush1.bf16.msra.mxu0 %v1515
        %1533 = vmatprep.subr.bf16.mxu0 0
        %1534 = vmatpush2.bf16.msra.mxu0 0
        %1535 = vmatprep.subr.bf16.mxu0 0
        %1536 = vmatpush2.bf16.msra.mxu0 0
        %1537 = vmatprep.subr.bf16.mxu0 0
        %1538 = vmatpush2.bf16.msra.mxu0 0
        %1539 = vmatprep.subr.bf16.mxu0 0
        %1540 = vmatpush2.bf16.msra.mxu0 0
        %1541 = vmatprep.subr.bf16.mxu0 0
        %1542 = vmatpush2.bf16.msra.mxu0 0
        %1543 = vmatprep.subr.bf16.mxu0 0
        %1544 = vmatpush2.bf16.msra.mxu0 0
        %1545 = vmatprep.subr.bf16.mxu0 0
        %1546 = vmatpush2.bf16.msra.mxu0 0
        %1547 = vmatprep.subr.bf16.mxu0 0
        %1548 = vmatpush2.bf16.msra.mxu0 0
        %1549 = vmatprep.mubr.bf16.mxu0 0
        %1550 = vmatmul.mubr.bf16.gmra.mxu0 %v1512
        %v1551 = vpop.f32.mrf.mxu0
        %v1552 = vadd.f32 0.0, %v1551
        %v1553 = vpop.f32.mrf.mxu0
        %v1554 = vpop.f32.mrf.mxu0
        %v1555 = vpop.f32.mrf.mxu0
        %1556 = vdwg.mxu0
        %1557 = vxpose.xlu0.c.b16.start [1/8] %v1020, 128
        %1558 = vxpose.xlu0.c.b16.cont [2/8] 0, 128
        %1559 = vxpose.xlu0.c.b16.cont [3/8] 0, 128
        %1560 = vxpose.xlu0.c.b16.cont [4/8] 0, 128
        %1561 = vxpose.xlu0.c.b16.cont [5/8] 0, 128
        %1562 = vxpose.xlu0.c.b16.cont [6/8] 0, 128
        %1563 = vxpose.xlu0.c.b16.cont [7/8] 0, 128
        %1564 = vxpose.xlu0.c.b16.end [8/8] 0, 128
        %v1565 = vpop.trf.xlu0
        %v1566 = vpop.trf.xlu0
        %v1567 = vpop.trf.xlu0
        %v1568 = vpop.trf.xlu0
        %v1569 = vpop.trf.xlu0
        %v1570 = vpop.trf.xlu0
        %v1571 = vpop.trf.xlu0
        %v1572 = vpop.trf.xlu0
        %v1574 = vsel %vm574, %v1565, 0
        %v1577 = vsel %vm599, %v1021, 0
        %1579 = vmatprep.subr.bf16.mxu0 0
        %1580 = vmatpush1.bf16.msra.mxu0 0
        %1581 = vmatprep.subr.bf16.mxu0 0
        %1582 = vmatpush1.bf16.msra.mxu0 0
        %1583 = vmatprep.subr.bf16.mxu0 0
        %1584 = vmatpush1.bf16.msra.mxu0 0
        %1585 = vmatprep.subr.bf16.mxu0 0
        %1586 = vmatpush1.bf16.msra.mxu0 0
        %1587 = vmatprep.subr.bf16.mxu0 0
        %1588 = vmatpush1.bf16.msra.mxu0 0
        %1589 = vmatprep.subr.bf16.mxu0 0
        %1590 = vmatpush1.bf16.msra.mxu0 0
        %1591 = vmatprep.subr.bf16.mxu0 0
        %1592 = vmatpush1.bf16.msra.mxu0 0
        %1593 = vmatprep.subr.bf16.mxu0 0
        %1594 = vmatpush1.bf16.msra.mxu0 %v1577
        %1595 = vmatprep.subr.bf16.mxu0 0
        %1596 = vmatpush2.bf16.msra.mxu0 0
        %1597 = vmatprep.subr.bf16.mxu0 0
        %1598 = vmatpush2.bf16.msra.mxu0 0
        %1599 = vmatprep.subr.bf16.mxu0 0
        %1600 = vmatpush2.bf16.msra.mxu0 0
        %1601 = vmatprep.subr.bf16.mxu0 0
        %1602 = vmatpush2.bf16.msra.mxu0 0
        %1603 = vmatprep.subr.bf16.mxu0 0
        %1604 = vmatpush2.bf16.msra.mxu0 0
        %1605 = vmatprep.subr.bf16.mxu0 0
        %1606 = vmatpush2.bf16.msra.mxu0 0
        %1607 = vmatprep.subr.bf16.mxu0 0
        %1608 = vmatpush2.bf16.msra.mxu0 0
        %1609 = vmatprep.subr.bf16.mxu0 0
        %1610 = vmatpush2.bf16.msra.mxu0 0
        %1611 = vmatprep.mubr.bf16.mxu0 0
        %1612 = vmatmul.mubr.bf16.gmra.mxu0 %v1574
        %v1613 = vpop.f32.mrf.mxu0
        %v1614 = vadd.f32 %v1552, %v1613
        %v1615 = vpop.f32.mrf.mxu0
        %v1616 = vpop.f32.mrf.mxu0
        %v1617 = vpop.f32.mrf.mxu0
        %1618 = vdwg.mxu0
        %v1619 = vpack.c.bf16 %v1614, %v1614
        %1620 = vst [vmem:[%s348] sm:$0xf] %v1619
        %s1621 = sand.u32 %s210, 1
        %s1622 = scalar_lea.sflag [#allocation4], %s1621
        %s1623 = sand.u32 %s210, 1
        %s1624 = smul.addr %s1623, 4
        %s1625 = scalar_lea.vmem [#allocation5], %s1624
        // Predicated region
        $region53: #{tpu_custom_call.1} parent=47 // pred_check
          %p1626 = pneg %p220
        $region54: #{tpu_custom_call.1} parent=47 // pred_check_branch
          %1628 = sbr.rel (%p1626) target = $region56
        $region55: #{tpu_custom_call.1} parent=47 // pred_region
          %s1630 = ssub.s32 64, 64
          %1631 = vsyncadd %s1622, %s1630
          %s1632 = smul.addr %s28, 2
          %s1633 = sadd.s32 %s29, %s1632
          %s1634 = smul.addr %s1633, 64
          %s1635 = scalar_lea.hbm %s7, %s1634
          %s1637 = sshll.u32 %s1625, 4
          %s1638 = int_to_ptr.vmem [resolvable:$true] %s1637
          %1640 = dma.vmem_to_hbm [thread:$0]  %s1638, 64, %s1635, %s1622
        $region56: #{tpu_custom_call.1} parent=47 // pred_fallthru
          _
      $region48: #{tpu_custom_call.1} parent=5 // pred_fallthru
        _
      %p1641 = scmp.le.s32.totalorder 2, %s19
      // Predicated region
      $region57: #{tpu_custom_call.1} parent=5 // pred_check
        %p1642 = pneg %p1641
      $region58: #{tpu_custom_call.1} parent=5 // pred_check_branch
        %1644 = sbr.rel (%p1642) target = $region60
      $region59: #{tpu_custom_call.1} parent=5 // pred_region
        %s1645 = ssub.s32 %s19, 2
        // Predicated region
        $region61: #{tpu_custom_call.1} parent=59 // pred_check
          %p1646 = pneg %p226
        $region62: #{tpu_custom_call.1} parent=59 // pred_check_branch
          %1648 = sbr.rel (%p1646) target = $region64
        $region63: #{tpu_custom_call.1} parent=59 // pred_region
          %s1649 = sand.u32 %s211, 1
          %s1650 = scalar_lea.sflag [#allocation4], %s1649
          %s1651 = sand.u32 %s211, 1
          %s1652 = smul.addr %s1651, 4
          %s1653 = scalar_lea.vmem [#allocation5], %s1652
          %1654 = dma.done %s1650, 64
        $region64: #{tpu_custom_call.1} parent=59 // pred_fallthru
          _
      $region60: #{tpu_custom_call.1} parent=5 // pred_fallthru
        _
    $region6: #{tpu_custom_call.1} parent=1 // loop_footer
      %s23 = sadd.s32 1, %s19
    $region7: #{tpu_custom_call.1} parent=1 // loop_footer_branch
      %18 = sbr.rel target = $region3
    $region8: #{tpu_custom_call.1} parent=1 // loop_exit
      _
    %1655 = vsyncpa [#allocation3], 1
    %s1656 = scalar_lea.sflag [#allocation3], 1
    %1657 = vsyncpa %s1656, 1
    %1658 = vsyncpa [#allocation4], 1
    %s1659 = scalar_lea.sflag [#allocation4], 1
    %1660 = vsyncpa %s1659, 1

</llo_original>
